<compile_context>
chip_gen: v5e
topology: v5e:2x2
jax: 0.10.0
libtpu: 0.0.40
codegen_flags: <defaults>
</compile_context>

<pallas_src>
import functools

import jax
import jax.numpy as jnp
from jax import lax
from jax.experimental import pallas as pl
from jax.experimental.pallas import tpu as pltpu

HEAD_SIZE = 32
D_MIX_LORA = 28
D_DECAY_LORA = 64
D_AAA_LORA = 24
D_KKK_LORA = 24
D_GATE_LORA = 120
D_MA_LORA = 24
D_MK_LORA = 24
D_MV_LORA = 24
LN_EPS = 6.4e-05

SCAN_FORWARD = 0
SCAN_BACKWARD = 1


def _round_up(x, m):
    return (x + m - 1) // m * m


def _pick_tile(dim, want, quantum):
    """Pick a (tile, padded_dim) so the tile is full-dim or a nice multiple."""
    if dim <= want:
        return dim, dim                       # full-dim block, always legal
    t = (want // quantum) * quantum
    while t >= quantum:
        if dim % t == 0:
            return t, dim                     # divides exactly, no padding
        t -= quantum
    t = (want // quantum) * quantum
    return t, _round_up(dim, t)               # rare: pad up


# ----------------------------------------------------------------------------
# Pallas kernel 1: tiled matmul (bf16 in, f32 accumulate) + fused epilogue.
# ----------------------------------------------------------------------------
def _mm_kernel(a_ref, b_ref, o_ref, acc_ref, *, act):
    @pl.when(pl.program_id(2) == 0)
    def _():
        acc_ref[...] = jnp.zeros_like(acc_ref)

    acc_ref[...] += jnp.dot(a_ref[...], b_ref[...],
                            preferred_element_type=jnp.float32)

    @pl.when(pl.program_id(2) == pl.num_programs(2) - 1)
    def _():
        r = acc_ref[...]
        if act == "tanh":
            r = jnp.tanh(r)
        elif act == "sigmoid":
            r = jax.nn.sigmoid(r)
        o_ref[...] = r.astype(o_ref.dtype)


def pallas_matmul(a, b, out_dtype=jnp.float32, act=None, tm=512, tn=256, tk=512):
    M, K = a.shape
    K2, N = b.shape
    assert K == K2
    a = a.astype(jnp.bfloat16)
    b = b.astype(jnp.bfloat16)

    tm_e, Mp = _pick_tile(M, tm, 8)
    tk_e, Kp = _pick_tile(K, tk, 128)
    tn_e, Np = _pick_tile(N, tn, 128)
    if (Mp, Kp) != (M, K):
        a = jnp.pad(a, ((0, Mp - M), (0, Kp - K)))
    if (Kp, Np) != (K, N):
        b = jnp.pad(b, ((0, Kp - K), (0, Np - N)))

    out = pl.pallas_call(
        functools.partial(_mm_kernel, act=act),
        out_shape=jax.ShapeDtypeStruct((Mp, Np), out_dtype),
        grid=(Mp // tm_e, Np // tn_e, Kp // tk_e),
        in_specs=[pl.BlockSpec((tm_e, tk_e), lambda i, j, k: (i, k)),
                  pl.BlockSpec((tk_e, tn_e), lambda i, j, k: (k, j))],
        out_specs=pl.BlockSpec((tm_e, tn_e), lambda i, j, k: (i, j)),
        scratch_shapes=[pltpu.VMEM((tm_e, tn_e), jnp.float32)],
        compiler_params=pltpu.CompilerParams(
            dimension_semantics=("parallel", "parallel", "arbitrary"),
            vmem_limit_bytes=32 * 1024 * 1024),
    )(a, b)
    if (Mp, Np) != (M, N):
        out = out[:M, :N]
    return out


# ----------------------------------------------------------------------------
# Pallas kernel 2: WKV7 recurrence (the CUDA `attn` kernel), chunked WY form.
#
# Serial semantics (per head, N = head_size, dec = exp(-exp(w))):
#   sa_t   = S_{t-1} a_t
#   S_t    = S_{t-1} diag(dec_t) + v_t k_t^T + sa_t b_t^T
#   y_t    = S_t r_t
#
# Chunked (exact reformulation, chunk length L, c_t = cumprod(dec)):
#   a^_t = a_t * c_{t-1}, b~_t = b_t / c_t, k~_t = k_t / c_t, r^_t = r_t * c_t
#   SA = (I - strict_tril(A^ B~^T))^{-1} (A^ S0^T + strict_tril(A^ K~^T) V)
#   Y  = R^ S0^T + tril(R^ B~^T) SA + tril(R^ K~^T) V
#   S' = S0 diag(c_L) + SA^T (B~ * c_L) + V^T (K~ * c_L)
# All heavy ops are (L x N)/(L x L) matmuls -> MXU.  Chunk length is capped at
# 64 so the 1/c_t rescaling stays well inside f32 range (dec >= exp(-e^{-0.5})).
# ----------------------------------------------------------------------------
def _wkv7_chunk_kernel(r_ref, w_ref, k_ref, v_ref, a_ref, b_ref, o_ref,
                       state_ref, *, n, gh, L):
    f32 = jnp.float32

    @pl.when(pl.program_id(2) == 0)
    def _():
        state_ref[...] = jnp.zeros_like(state_ref)

    neg_ew = -jnp.exp(w_ref[0].astype(f32))          # (L, GW) log-decay g_t
    rP = r_ref[0].astype(f32)
    kP = k_ref[0].astype(f32)
    vP = v_ref[0].astype(f32)
    aP = a_ref[0].astype(f32)
    bP = b_ref[0].astype(f32)

    row = lax.broadcasted_iota(jnp.int32, (L, L), 0)
    col = lax.broadcasted_iota(jnp.int32, (L, L), 1)
    tril_inc = (col <= row).astype(f32)
    tril_exc = (col < row).astype(f32)
    eye = (col == row).astype(f32)

    # cumulative log-decays via triangular-ones matmul (MXU, no cumsum op)
    g_inc = jnp.dot(tril_inc, neg_ew, preferred_element_type=f32)
    g_exc = g_inc - neg_ew

    a_hat = aP * jnp.exp(g_exc)
    b_til = bP * jnp.exp(-g_inc)
    k_til = kP * jnp.exp(-g_inc)
    r_hat = rP * jnp.exp(g_inc)
    c_last = jnp.exp(g_inc[L - 1:L, :])              # (1, GW) full-chunk decay

    n_dbl = max(int(L - 1).bit_length(), 0)

    y_heads = []
    for h in range(gh):                              # static unroll over heads
        lo, hi = h * n, (h + 1) * n
        S0 = state_ref[h, :, :]                      # (n, n) f32
        Ah, Bh = a_hat[:, lo:hi], b_til[:, lo:hi]
        Kh, Rh = k_til[:, lo:hi], r_hat[:, lo:hi]
        Vh = vP[:, lo:hi]
        cL = c_last[:, lo:hi]                        # (1, n)

        m_ab = tril_exc * jnp.einsum("tj,sj->ts", Ah, Bh)
        m_ak = tril_exc * jnp.einsum("tj,sj->ts", Ah, Kh)

        # (I - m_ab)^{-1} via Neumann doubling (m_ab strictly lower-triangular)
        t_mat = eye + m_ab
        p_mat = m_ab
        for _s in range(1, n_dbl):
            p_mat = jnp.dot(p_mat, p_mat, preferred_element_type=f32)
            t_mat = t_mat + jnp.dot(t_mat, p_mat, preferred_element_type=f32)

        rhs = (jnp.einsum("tj,ij->ti", Ah, S0)
               + jnp.dot(m_ak, Vh, preferred_element_type=f32))
        sa = jnp.dot(t_mat, rhs, preferred_element_type=f32)          # (L, n)

        m_rb = tril_inc * jnp.einsum("tj,sj->ts", Rh, Bh)
        m_rk = tril_inc * jnp.einsum("tj,sj->ts", Rh, Kh)
        yh = (jnp.einsum("tj,ij->ti", Rh, S0)
              + jnp.dot(m_rb, sa, preferred_element_type=f32)
              + jnp.dot(m_rk, Vh, preferred_element_type=f32))
        y_heads.append(yh)

        s_new = (S0 * cL
                 + jnp.einsum("ti,tj->ij", sa, Bh * cL)
                 + jnp.einsum("ti,tj->ij", Vh, Kh * cL))
        state_ref[h, :, :] = s_new

    # one lane-dense (L, GW) store per chunk
    o_ref[0, :, :] = jnp.concatenate(y_heads, axis=1).astype(o_ref.dtype)


def wkv7(r, w, k, v, a, b, head_size=HEAD_SIZE, chunk=64):
    B, T, C = r.shape
    GW = 128 if C % 128 == 0 else C                  # lane-dense head-group width
    GH = GW // head_size
    assert GW % head_size == 0 and C % GW == 0
    Lc = max(1, min(chunk, pl.next_power_of_2(T)))   # power-of-two chunk length
    Tp = _round_up(T, Lc)
    if Tp != T:
        pad = ((0, 0), (0, Tp - T), (0, 0))
        r, w, k, v, a, b = (jnp.pad(t, pad) for t in (r, w, k, v, a, b))

    spec = pl.BlockSpec((1, Lc, GW), lambda bb, g, c: (bb, c, g))
    kernel = functools.partial(_wkv7_chunk_kernel, n=head_size, gh=GH, L=Lc)
    out = pl.pallas_call(
        kernel,
        out_shape=jax.ShapeDtypeStruct((B, Tp, C), jnp.bfloat16),
        grid=(B, C // GW, Tp // Lc),
        in_specs=[spec] * 6,
        out_specs=spec,
        scratch_shapes=[pltpu.VMEM((GH, head_size, head_size), jnp.float32)],
        compiler_params=pltpu.CompilerParams(
            dimension_semantics=("parallel", "parallel", "arbitrary"),
            vmem_limit_bytes=32 * 1024 * 1024),
    )(r, w, k, v, a, b)
    return out[:, :T] if Tp != T else out


def wkv7_reference(r, w, k, v, a, b, head_size=HEAD_SIZE):
    """Pure-JAX serial reference of the WKV7 recurrence (f32)."""
    B, T, C = r.shape
    H = C // head_size
    f32 = jnp.float32

    def split(t):
        return t.astype(f32).reshape(B, T, H, head_size)

    rf, kf, vf, af, bff = map(split, (r, k, v, a, b))
    dec = jnp.exp(-jnp.exp(w.astype(f32))).reshape(B, T, H, head_size)

    def step(S, xs):
        r_t, d_t, k_t, v_t, a_t, b_t = xs
        sa = jnp.einsum("bhij,bhj->bhi", S, a_t)
        S = (S * d_t[:, :, None, :]
             + v_t[..., :, None] * k_t[..., None, :]
             + sa[..., :, None] * b_t[..., None, :])
        y = jnp.einsum("bhij,bhj->bhi", S, r_t)
        return S, y

    xs = tuple(jnp.moveaxis(t, 1, 0) for t in (rf, dec, kf, vf, af, bff))
    S0 = jnp.zeros((B, H, head_size, head_size), f32)
    _, ys = lax.scan(step, S0, xs)
    return jnp.moveaxis(ys, 0, 1).reshape(B, T, C)


# ----------------------------------------------------------------------------
# Pallas kernel 3: fused per-head GroupNorm(ln_x) + bonus residual + gate.
#   out = (GroupNorm(x_attn) + sum_head(r*k*faaaa)*v) * g
# Per-head reductions via (C,H) pooling + (H,C) broadcast matmuls; centered
# variance for precision.
# ----------------------------------------------------------------------------
def _postmix_kernel(x_ref, r_ref, k_ref, v_ref, g_ref, pool_ref, bcast_ref,
                    faaaa_ref, gamma_ref, beta_ref, o_ref, *, inv_n):
    f32 = jnp.float32
    pool = pool_ref[...]                                          # (C, H)
    bcast = bcast_ref[...]                                        # (H, C)
    xf = x_ref[...].astype(f32)                                   # (R, C)
    mean = jnp.dot(jnp.dot(xf, pool, preferred_element_type=f32) * inv_n,
                   bcast, preferred_element_type=f32)
    xc = xf - mean
    var = jnp.dot(jnp.dot(xc * xc, pool, preferred_element_type=f32) * inv_n,
                  bcast, preferred_element_type=f32)
    xn = xc * lax.rsqrt(var + LN_EPS)
    xn = xn * gamma_ref[...] + beta_ref[...]

    rf = r_ref[...].astype(f32)
    kf = k_ref[...].astype(f32)
    vf = v_ref[...].astype(f32)
    gf = g_ref[...].astype(f32)
    bsum = jnp.dot(jnp.dot(rf * kf * faaaa_ref[...], pool,
                           preferred_element_type=f32),
                   bcast, preferred_element_type=f32)
    o_ref[...] = ((xn + bsum * vf) * gf).astype(o_ref.dtype)


def postmix(x, r, k, v, g, pool, bcast, faaaa, gamma, beta,
            head_size=HEAD_SIZE, row_tile=512):
    BT, C = x.shape
    H = C // head_size
    rt, BTp = _pick_tile(BT, row_tile, 8)

    def pad_rows(t):
        return jnp.pad(t, ((0, BTp - BT), (0, 0))) if BTp != BT else t

    tiled = [pad_rows(t) for t in (x, r, k, v, g)]
    row_spec = pl.BlockSpec((rt, C), lambda i: (i, 0))
    pool_spec = pl.BlockSpec((C, H), lambda i: (0, 0))
    bcast_spec = pl.BlockSpec((H, C), lambda i: (0, 0))
    vec_spec = pl.BlockSpec((1, C), lambda i: (0, 0))
    out = pl.pallas_call(
        functools.partial(_postmix_kernel, inv_n=1.0 / float(head_size)),
        out_shape=jax.ShapeDtypeStruct((BTp, C), jnp.bfloat16),
        grid=(BTp // rt,),
        in_specs=[row_spec] * 5 + [pool_spec, bcast_spec,
                                   vec_spec, vec_spec, vec_spec],
        out_specs=row_spec,
        compiler_params=pltpu.CompilerParams(
            dimension_semantics=("parallel",),
            vmem_limit_bytes=48 * 1024 * 1024),
    )(*tiled, pool, bcast, faaaa, gamma, beta)
    return out[:BT] if BTp != BT else out


# ----------------------------------------------------------------------------
# Parameter initialization (deterministic; same shapes as the torch __init__).
# ----------------------------------------------------------------------------
def init_params(key, n_embd, n_layer, layer_id, n_head, head_size):
    dim_att = n_embd
    ratio_0_to_1 = layer_id / (n_layer - 1)
    ratio_1_to_almost0 = 1.0 - layer_id / n_layer
    ddd = (jnp.arange(n_embd, dtype=jnp.float32) / n_embd)[None, None, :]

    p = {}
    p["time_maa_x"] = 1.0 - jnp.power(ddd, 0.6 * ratio_1_to_almost0 ** 0.9)
    p["time_maa_rg"] = 1.0 - jnp.power(ddd, 0.2 * ratio_1_to_almost0)
    p["time_maa_wa"] = 1.0 - jnp.power(ddd, 0.9 * ratio_1_to_almost0)
    p["time_maa_k"] = 1.0 - (jnp.power(ddd, 0.9 * ratio_1_to_almost0) + 0.4 * ratio_0_to_1)
    p["time_maa_v"] = 1.0 - (jnp.power(ddd, 0.4 * ratio_1_to_almost0) + 0.6 * ratio_0_to_1)
    nn_ = jnp.arange(dim_att, dtype=jnp.float32)
    decay_speed = -7.0 + 5.0 * (nn_ / (dim_att - 1)) ** (0.85 + 1.0 * ratio_0_to_1 ** 0.5)
    p["time_decay"] = decay_speed[None, None, :] + 0.5

    keys = jax.random.split(key, 32)
    ki = iter(range(32))

    def u(shape, scale):
        return jax.random.uniform(keys[next(ki)], shape, jnp.float32, -scale, scale)

    # torch zero/ortho-inits replaced by small deterministic uniforms (demo).
    p["time_faaaa"] = u((1, 1, n_head, head_size), 0.05)
    p["time_aaaaa"] = u((1, 1, dim_att), 0.05)
    p["time_maa_w1"] = u((n_embd, D_MIX_LORA * 4), 0.05)
    p["time_maa_w2"] = u((4, D_MIX_LORA, n_embd), 0.1)
    p["time_decay_w1"] = u((n_embd, D_DECAY_LORA), 0.05)
    p["time_decay_w2"] = u((D_DECAY_LORA, dim_att), 0.1)
    p["time_aaa_w1"] = u((n_embd, D_AAA_LORA), 0.05)
    p["time_aaa_w2"] = u((D_AAA_LORA, dim_att), 0.1)
    p["time_kkk_w1"] = u((n_embd, D_KKK_LORA), 0.05)
    p["time_kkk_w2"] = u((D_KKK_LORA, dim_att), 0.1)
    p["gate_w1"] = u((n_embd, D_GATE_LORA), 0.05)
    p["gate_w2"] = u((D_GATE_LORA, dim_att), 0.1)
    p["ma_w1"] = u((n_embd, D_MA_LORA), 0.05)
    p["ma_w2"] = u((D_MA_LORA, dim_att), 0.1)
    p["time_misc_a"] = u((1, 1, n_embd), 0.05)
    p["mk_w1"] = u((n_embd, D_MK_LORA), 0.05)
    p["mk_w2"] = u((D_MK_LORA, dim_att), 0.1)
    p["time_misc_k"] = u((1, 1, n_embd), 0.05)
    if layer_id != 0:
        p["mv_w1"] = u((n_embd, D_MV_LORA), 0.05)
        p["mv_w2"] = u((D_MV_LORA, dim_att), 0.1)
        p["time_misc_v"] = 1.0 + u((1, 1, n_embd), 0.05)

    s = n_embd ** 0.5
    p["receptance_w"] = u((dim_att, n_embd), 0.5 / s)
    p["key_w"] = u((dim_att, n_embd), 0.05 / s)
    p["value_w"] = u((dim_att, n_embd), 0.5 / s)
    p["output_w"] = u((n_embd, dim_att), 0.1 / s)  # torch zero-inits; small nonzero here
    p["ln_x_weight"] = jnp.ones((dim_att,), jnp.float32)
    p["ln_x_bias"] = jnp.zeros((dim_att,), jnp.float32)
    return p


# ----------------------------------------------------------------------------
# One-time weight fusion: concat LoRAs sharing an input, block-diagonal second
# stages, bf16 weights for the MXU, GroupNorm pooling/broadcast matrices.
# ----------------------------------------------------------------------------
def _block_diag(mats):
    rows = sum(m.shape[0] for m in mats)
    cols = sum(m.shape[1] for m in mats)
    out = jnp.zeros((rows, cols), mats[0].dtype)
    r0 = c0 = 0
    for m in mats:
        out = out.at[r0:r0 + m.shape[0], c0:c0 + m.shape[1]].set(m)
        r0 += m.shape[0]
        c0 += m.shape[1]
    return out


def prepare_params(p):
    q = {}
    C = p["receptance_w"].shape[1]
    H = C // HEAD_SIZE
    bf = jnp.bfloat16
    f32 = jnp.float32

    for name in ("time_maa_x", "time_maa_rg", "time_maa_wa", "time_maa_k",
                 "time_maa_v", "time_decay", "time_aaaaa", "time_misc_a",
                 "time_misc_k"):
        q[name + "_f"] = p[name].reshape(1, -1).astype(f32)
    if "time_misc_v" in p:
        q["time_misc_v_f"] = p["time_misc_v"].reshape(1, -1).astype(f32)

    q["time_maa_w1_b"] = p["time_maa_w1"].astype(bf)
    q["maa_w2_bd"] = _block_diag([p["time_maa_w2"][i] for i in range(4)]).astype(bf)
    q["rg_fused_w"] = jnp.concatenate(
        [p["receptance_w"].T, p["gate_w1"]], axis=1).astype(bf)
    q["gate_w2_b"] = p["gate_w2"].astype(bf)
    q["wa_lora_w1"] = jnp.concatenate(
        [p["time_decay_w1"], p["time_aaa_w1"], p["ma_w1"]], axis=1).astype(bf)
    q["wa_lora_w2_bd"] = _block_diag(
        [p["time_decay_w2"], p["time_aaa_w2"], p["ma_w2"]]).astype(bf)
    q["k_fused_w"] = jnp.concatenate(
        [p["key_w"].T, p["time_kkk_w1"], p["mk_w1"]], axis=1).astype(bf)
    q["k_lora_w2_bd"] = _block_diag([p["time_kkk_w2"], p["mk_w2"]]).astype(bf)
    q["value_w_t"] = p["value_w"].T.astype(bf)
    if "mv_w1" in p:
        q["v_fused_w"] = jnp.concatenate(
            [p["value_w"].T, p["mv_w1"]], axis=1).astype(bf)
        q["mv_w2_b"] = p["mv_w2"].astype(bf)
    q["output_w_t"] = p["output_w"].T.astype(bf)

    gid = jnp.arange(C) // HEAD_SIZE
    hid = jnp.arange(H)
    pool = (gid[:, None] == hid[None, :]).astype(f32)          # (C, H)
    q["gn_pool"] = pool
    q["gn_bcast"] = pool.T                                     # (H, C)
    q["faaaa_flat"] = p["time_faaaa"].reshape(1, C).astype(f32)
    q["ln_x_w_flat"] = p["ln_x_weight"].reshape(1, C).astype(f32)
    q["ln_x_b_flat"] = p["ln_x_bias"].reshape(1, C).astype(f32)
    return q


# ----------------------------------------------------------------------------
# Forward pass (matches RWKV7._forward / RWKV7.forward semantics).
# ----------------------------------------------------------------------------
def _rwkv7_inner(p, x, v1, layer_id, H, N):
    B, T, C = x.shape
    BT = B * T
    BTp = _round_up(BT, 256)          # pad row count once; all matmuls pad-free
    bf = jnp.bfloat16
    f32 = jnp.float32

    # token shift: nn.ZeroPad2d((0,0,1,-1)) -> xx[t] = x[t-1] - x[t], x[-1] = 0
    x_shift = jnp.pad(x, ((0, 0), (1, 0), (0, 0)))[:, :T, :]
    xx = x_shift - x

    x2 = x.reshape(BT, C)
    xx2 = xx.reshape(BT, C)
    if BTp != BT:
        x2 = jnp.pad(x2, ((0, BTp - BT), (0, 0)))
        xx2 = jnp.pad(xx2, ((0, BTp - BT), (0, 0)))

    xxx = (x2 + xx2 * p["time_maa_x_f"]).astype(bf)
    mix = pallas_matmul(xxx, p["time_maa_w1_b"], out_dtype=bf, act="tanh")
    deltas = pallas_matmul(mix, p["maa_w2_bd"], out_dtype=bf)         # (BTp, 4C)
    drg = deltas[:, 0 * C:1 * C].astype(f32)
    dwa = deltas[:, 1 * C:2 * C].astype(f32)
    dk = deltas[:, 2 * C:3 * C].astype(f32)
    dv = deltas[:, 3 * C:4 * C].astype(f32)

    xrg = (x2 + xx2 * (p["time_maa_rg_f"] + drg)).astype(bf)
    xwa = (x2 + xx2 * (p["time_maa_wa_f"] + dwa)).astype(bf)
    xk = (x2 + xx2 * (p["time_maa_k_f"] + dk)).astype(bf)
    xv = (x2 + xx2 * (p["time_maa_v_f"] + dv)).astype(bf)

    # fused first-stage projections (receptance|gate, decay|aaa|ma, key|kkk|mk)
    hrg = pallas_matmul(xrg, p["rg_fused_w"], out_dtype=bf)           # (BTp, C+120)
    r_full = hrg[:, :C]                                               # bf16
    g_full = pallas_matmul(
        jax.nn.sigmoid(hrg[:, C:].astype(f32)).astype(bf),
        p["gate_w2_b"], out_dtype=bf)                                 # (BTp, C)

    hwa = pallas_matmul(xwa, p["wa_lora_w1"], out_dtype=bf)           # (BTp, 112)
    hwa = jnp.concatenate(
        [jnp.tanh(hwa[:, :D_DECAY_LORA].astype(f32)).astype(bf),
         hwa[:, D_DECAY_LORA:]], axis=1)
    wa_out = pallas_matmul(hwa, p["wa_lora_w2_bd"], out_dtype=f32)    # (BTp, 3C)
    w = -jax.nn.softplus(-(p["time_decay_f"] + wa_out[:, :C])) - 0.5
    aa = jax.nn.sigmoid(p["time_aaaaa_f"] + wa_out[:, C:2 * C])
    ma = jax.nn.sigmoid(p["time_misc_a_f"] + wa_out[:, 2 * C:])

    hk = pallas_matmul(xk, p["k_fused_w"], out_dtype=bf)              # (BTp, C+48)
    k = hk[:, :C].astype(f32)
    hk_lora = jnp.concatenate(
        [jnp.tanh(hk[:, C:C + D_KKK_LORA].astype(f32)).astype(bf),
         hk[:, C + D_KKK_LORA:]], axis=1)
    k_out = pallas_matmul(hk_lora, p["k_lora_w2_bd"], out_dtype=f32)  # (BTp, 2C)
    kk = k + k_out[:, :C]
    mk = jax.nn.sigmoid(p["time_misc_k_f"] + k_out[:, C:])

    if layer_id == 0:
        v = pallas_matmul(xv, p["value_w_t"], out_dtype=f32)
        v1_out = v[:BT].reshape(B, T, C)
    else:
        hv = pallas_matmul(xv, p["v_fused_w"], out_dtype=f32)         # (BTp, C+24)
        v = hv[:, :C]
        mv = jax.nn.sigmoid(
            p["time_misc_v_f"]
            + pallas_matmul(hv[:, C:].astype(bf), p["mv_w2_b"], out_dtype=f32))
        v1p = v1.reshape(BT, C)
        if BTp != BT:
            v1p = jnp.pad(v1p, ((0, BTp - BT), (0, 0)))
        v = v + (v1p - v) * mv
        v1_out = v1

    # per-head L2 normalize of kk (F.normalize, eps=1e-12)
    kk_h = kk.reshape(BTp, H, N)
    norm = jnp.sqrt(jnp.sum(kk_h * kk_h, axis=-1, keepdims=True))
    kk = (kk_h / jnp.maximum(norm, 1e-12)).reshape(BTp, C)

    k = k * ma + k * aa * (1.0 - ma)
    k = k * jnp.exp(jnp.minimum(w * mk, 0.0))

    # WKV7 recurrence inputs in bf16 (matches reference .bfloat16() casts)
    r_b = r_full
    w_b = w.astype(bf)
    k_b = k.astype(bf)
    v_b = v.astype(bf)
    a_b = (-kk).astype(bf)
    b_b = (kk * aa).astype(bf)

    def to_btc(t):
        return t[:BT].reshape(B, T, C)

    y = wkv7(to_btc(r_b), to_btc(w_b), to_btc(k_b), to_btc(v_b),
             to_btc(a_b), to_btc(b_b), head_size=N)                   # (B,T,C) bf16

    y2 = y.reshape(BT, C)
    if BTp != BT:
        y2 = jnp.pad(y2, ((0, BTp - BT), (0, 0)))

    # fused GroupNorm(ln_x) + bonus residual + gate
    xg = postmix(y2, r_b, k_b, v_b, g_full,
                 p["gn_pool"], p["gn_bcast"], p["faaaa_flat"],
                 p["ln_x_w_flat"], p["ln_x_b_flat"], head_size=N)

    out = pallas_matmul(xg, p["output_w_t"], out_dtype=f32)[:BT].reshape(B, T, C)
    return out, v1_out


def rwkv7_forward(p, x, v1, layer_id, n_head, head_size,
                  scan=(SCAN_FORWARD, SCAN_BACKWARD)):
    mode = scan[layer_id % len(scan)]
    if mode == SCAN_FORWARD:
        return _rwkv7_inner(p, x, v1, layer_id, n_head, head_size)
    # SCAN_BACKWARD: flip along tokens, run, flip back
    xf = jnp.flip(x, axis=1)
    v1f = jnp.flip(v1, axis=1) if v1 is not None else None
    out, v1o = _rwkv7_inner(p, xf, v1f, layer_id, n_head, head_size)
    return jnp.flip(out, axis=1), jnp.flip(v1o, axis=1)


if __name__ == "__main__":
    # ---- standalone numerical check of the chunked WKV7 kernel --------------
    Bc, Tc, Cc = 2, 40, 64                  # multi-chunk + T padding path
    Hc, Nc = Cc // HEAD_SIZE, HEAD_SIZE
    ks = jax.random.split(jax.random.PRNGKey(0), 8)
    bfd = jnp.bfloat16
    r_c = (0.2 * jax.random.normal(ks[0], (Bc, Tc, Cc))).astype(bfd)
    k_c = (0.2 * jax.random.normal(ks[1], (Bc, Tc, Cc))).astype(bfd)
    v_c = (0.2 * jax.random.normal(ks[2], (Bc, Tc, Cc))).astype(bfd)
    w_c = (-jax.nn.softplus(jax.random.normal(ks[3], (Bc, Tc, Cc))) - 0.5).astype(bfd)
    kkc = jax.random.normal(ks[4], (Bc, Tc, Hc, Nc))
    kkc = kkc / jnp.maximum(jnp.linalg.norm(kkc, axis=-1, keepdims=True), 1e-12)
    kkc = kkc.reshape(Bc, Tc, Cc)
    a_g = jax.nn.sigmoid(jax.random.normal(ks[5], (Bc, Tc, Cc)))
    a_c = (-kkc).astype(bfd)
    b_c = (kkc * a_g).astype(bfd)

    y_kernel = wkv7(r_c, w_c, k_c, v_c, a_c, b_c, head_size=Nc, chunk=16)
    y_ref = wkv7_reference(r_c, w_c, k_c, v_c, a_c, b_c, head_size=Nc)
    jax.block_until_ready((y_kernel, y_ref))
    err = float(jnp.max(jnp.abs(y_kernel.astype(jnp.float32) - y_ref)))
    scale = float(jnp.max(jnp.abs(y_ref)))
    assert err <= 1e-2 + 2e-2 * scale, f"wkv7 mismatch: err={err} scale={scale}"

    # ---- full RWKV7 layer forward (forward + backward scan) -----------------
    B, T, C = 2, 16, 64                     # batch, tokens, channels
    H, N = C // HEAD_SIZE, HEAD_SIZE
    n_layer = 2

    kx, kp0, kp1 = jax.random.split(jax.random.PRNGKey(1), 3)
    x = 0.1 * jax.random.normal(kx, (B, T, C), jnp.float32)

    p0 = prepare_params(init_params(kp0, C, n_layer, layer_id=0, n_head=H, head_size=N))
    p1 = prepare_params(init_params(kp1, C, n_layer, layer_id=1, n_head=H, head_size=N))

    # layer 0: forward scan, produces v1
    out0, v1 = rwkv7_forward(p0, x, None, layer_id=0, n_head=H, head_size=N)
    # layer 1: backward scan, consumes v1 (exercises the mv residual-value path)
    out1, v1b = rwkv7_forward(p1, out0, v1, layer_id=1, n_head=H, head_size=N)

    jax.block_until_ready((out0, out1, v1, v1b))
    assert out0.shape == (B, T, C) and out1.shape == (B, T, C)
    assert v1.shape == (B, T, C)
    assert bool(jnp.all(jnp.isfinite(out1)))
    print("KERNEL_OK")
</pallas_src>

<mosaic_0001>
module attributes {stable_mosaic.version = 11 : i64} {
  func.func @_wkv7_chunk_kernel(%arg0: i32, %arg1: i32, %arg2: i32, %arg3: memref<1x16x64xbf16, #tpu.memory_space<vmem>>, %arg4: memref<1x16x64xbf16, #tpu.memory_space<vmem>>, %arg5: memref<1x16x64xbf16, #tpu.memory_space<vmem>>, %arg6: memref<1x16x64xbf16, #tpu.memory_space<vmem>>, %arg7: memref<1x16x64xbf16, #tpu.memory_space<vmem>>, %arg8: memref<1x16x64xbf16, #tpu.memory_space<vmem>>, %arg9: memref<1x16x64xbf16, #tpu.memory_space<vmem>>, %arg10: memref<2x32x32xf32, #tpu.memory_space<vmem>>) attributes {dimension_semantics = [#tpu.dimension_semantics<parallel>, #tpu.dimension_semantics<parallel>, #tpu.dimension_semantics<arbitrary>], iteration_bounds = array<i64: 2, 1, 3>, scalar_prefetch = 0 : i64, scratch_operands = 1 : i64, tpu.core_type = #tpu.core_type<tc>, window_params = [{transform_indices = @transform_0, window_bounds = array<i64: 1, 16, 64>}, {transform_indices = @transform_1, window_bounds = array<i64: 1, 16, 64>}, {transform_indices = @transform_2, window_bounds = array<i64: 1, 16, 64>}, {transform_indices = @transform_3, window_bounds = array<i64: 1, 16, 64>}, {transform_indices = @transform_4, window_bounds = array<i64: 1, 16, 64>}, {transform_indices = @transform_5, window_bounds = array<i64: 1, 16, 64>}, {transform_indices = @transform_6, window_bounds = array<i64: 1, 16, 64>}]} {
    %c0_i32 = arith.constant 0 : i32
    %0 = arith.cmpi eq, %arg2, %c0_i32 : i32
    %1 = arith.extui %0 : i1 to i32
    %c0_i32_0 = arith.constant 0 : i32
    %2 = arith.cmpi ne, %1, %c0_i32_0 : i32
    scf.if %2 {
      %cst_71 = arith.constant 0.000000e+00 : f32
      %152 = vector.broadcast %cst_71 : f32 to vector<2x32x32xf32>
      %c0_72 = arith.constant 0 : index
      %c0_73 = arith.constant 0 : index
      %c0_74 = arith.constant 0 : index
      %153 = vector.load %arg10[%c0_72, %c0_73, %c0_74] : memref<2x32x32xf32, #tpu.memory_space<vmem>>, vector<2x32x32xf32>
      tpu.vector_store %arg10[%c0_72, %c0_73, %c0_74], %152 {strides = array<i32>} : memref<2x32x32xf32, #tpu.memory_space<vmem>>, vector<2x32x32xf32>,
    } else {
    }
    %c0 = arith.constant 0 : index
    %c0_1 = arith.constant 0 : index
    %c0_2 = arith.constant 0 : index
    %3 = vector.load %arg4[%c0, %c0_1, %c0_2] : memref<1x16x64xbf16, #tpu.memory_space<vmem>>, vector<1x16x64xbf16>
    %4 = vector.shape_cast %3 : vector<1x16x64xbf16> to vector<16x64xbf16>
    %5 = arith.extf %4 : vector<16x64xbf16> to vector<16x64xf32>
    %6 = math.exp %5 : vector<16x64xf32>
    %cst = arith.constant 0.000000e+00 : f32
    %7 = vector.broadcast %cst : f32 to vector<16x64xf32>
    %8 = arith.subf %7, %6 : vector<16x64xf32>
    %c0_3 = arith.constant 0 : index
    %c0_4 = arith.constant 0 : index
    %c0_5 = arith.constant 0 : index
    %9 = vector.load %arg3[%c0_3, %c0_4, %c0_5] : memref<1x16x64xbf16, #tpu.memory_space<vmem>>, vector<1x16x64xbf16>
    %10 = vector.shape_cast %9 : vector<1x16x64xbf16> to vector<16x64xbf16>
    %11 = arith.extf %10 : vector<16x64xbf16> to vector<16x64xf32>
    %c0_6 = arith.constant 0 : index
    %c0_7 = arith.constant 0 : index
    %c0_8 = arith.constant 0 : index
    %12 = vector.load %arg5[%c0_6, %c0_7, %c0_8] : memref<1x16x64xbf16, #tpu.memory_space<vmem>>, vector<1x16x64xbf16>
    %13 = vector.shape_cast %12 : vector<1x16x64xbf16> to vector<16x64xbf16>
    %14 = arith.extf %13 : vector<16x64xbf16> to vector<16x64xf32>
    %c0_9 = arith.constant 0 : index
    %c0_10 = arith.constant 0 : index
    %c0_11 = arith.constant 0 : index
    %15 = vector.load %arg6[%c0_9, %c0_10, %c0_11] : memref<1x16x64xbf16, #tpu.memory_space<vmem>>, vector<1x16x64xbf16>
    %16 = vector.shape_cast %15 : vector<1x16x64xbf16> to vector<16x64xbf16>
    %17 = arith.extf %16 : vector<16x64xbf16> to vector<16x64xf32>
    %c0_12 = arith.constant 0 : index
    %c0_13 = arith.constant 0 : index
    %c0_14 = arith.constant 0 : index
    %18 = vector.load %arg7[%c0_12, %c0_13, %c0_14] : memref<1x16x64xbf16, #tpu.memory_space<vmem>>, vector<1x16x64xbf16>
    %19 = vector.shape_cast %18 : vector<1x16x64xbf16> to vector<16x64xbf16>
    %20 = arith.extf %19 : vector<16x64xbf16> to vector<16x64xf32>
    %c0_15 = arith.constant 0 : index
    %c0_16 = arith.constant 0 : index
    %c0_17 = arith.constant 0 : index
    %21 = vector.load %arg8[%c0_15, %c0_16, %c0_17] : memref<1x16x64xbf16, #tpu.memory_space<vmem>>, vector<1x16x64xbf16>
    %22 = vector.shape_cast %21 : vector<1x16x64xbf16> to vector<16x64xbf16>
    %23 = arith.extf %22 : vector<16x64xbf16> to vector<16x64xf32>
    %24 = tpu.iota {dimensions = array<i32: 0>} : vector<16x16xi32>
    %25 = tpu.iota {dimensions = array<i32: 1>} : vector<16x16xi32>
    %26 = arith.cmpi sle, %25, %24 : vector<16x16xi32>
    %27 = arith.extui %26 : vector<16x16xi1> to vector<16x16xi32>
    %28 = arith.sitofp %27 : vector<16x16xi32> to vector<16x16xf32>
    %29 = arith.cmpi slt, %25, %24 : vector<16x16xi32>
    %30 = arith.extui %29 : vector<16x16xi1> to vector<16x16xi32>
    %31 = arith.sitofp %30 : vector<16x16xi32> to vector<16x16xf32>
    %32 = arith.cmpi eq, %25, %24 : vector<16x16xi32>
    %33 = arith.extui %32 : vector<16x16xi1> to vector<16x16xi32>
    %34 = arith.sitofp %33 : vector<16x16xi32> to vector<16x16xf32>
    %cst_18 = arith.constant dense<0.000000e+00> : vector<16x64xf32>
    %35 = tpu.matmul %28, %8, %cst_18 {dimension_numbers = #tpu.dot_dimension_numbers<[1], [0], [0], [1], [0, 0, 1, 1], [], []>} : vector<16x16xf32>, vector<16x64xf32>, vector<16x64xf32> -> vector<16x64xf32>
    %36 = arith.subf %35, %8 : vector<16x64xf32>
    %37 = math.exp %36 : vector<16x64xf32>
    %38 = arith.mulf %20, %37 : vector<16x64xf32>
    %cst_19 = arith.constant 0.000000e+00 : f32
    %39 = vector.broadcast %cst_19 : f32 to vector<16x64xf32>
    %40 = arith.subf %39, %35 : vector<16x64xf32>
    %41 = math.exp %40 : vector<16x64xf32>
    %42 = arith.mulf %23, %41 : vector<16x64xf32>
    %cst_20 = arith.constant 0.000000e+00 : f32
    %43 = vector.broadcast %cst_20 : f32 to vector<16x64xf32>
    %44 = arith.subf %43, %35 : vector<16x64xf32>
    %45 = math.exp %44 : vector<16x64xf32>
    %46 = arith.mulf %14, %45 : vector<16x64xf32>
    %47 = math.exp %35 : vector<16x64xf32>
    %48 = arith.mulf %11, %47 : vector<16x64xf32>
    %49 = vector.extract_strided_slice %35 {offsets = [15, 0], sizes = [1, 64], strides = [1, 1]} : vector<16x64xf32> to vector<1x64xf32>
    %50 = math.exp %49 : vector<1x64xf32>
    %c0_21 = arith.constant 0 : index
    %c0_22 = arith.constant 0 : index
    %c0_23 = arith.constant 0 : index
    %51 = vector.load %arg10[%c0_21, %c0_22, %c0_23] : memref<2x32x32xf32, #tpu.memory_space<vmem>>, vector<1x32x32xf32>
    %52 = vector.shape_cast %51 : vector<1x32x32xf32> to vector<32x32xf32>
    %53 = vector.extract_strided_slice %38 {offsets = [0, 0], sizes = [16, 32], strides = [1, 1]} : vector<16x64xf32> to vector<16x32xf32>
    %54 = vector.extract_strided_slice %42 {offsets = [0, 0], sizes = [16, 32], strides = [1, 1]} : vector<16x64xf32> to vector<16x32xf32>
    %55 = vector.extract_strided_slice %46 {offsets = [0, 0], sizes = [16, 32], strides = [1, 1]} : vector<16x64xf32> to vector<16x32xf32>
    %56 = vector.extract_strided_slice %48 {offsets = [0, 0], sizes = [16, 32], strides = [1, 1]} : vector<16x64xf32> to vector<16x32xf32>
    %57 = vector.extract_strided_slice %17 {offsets = [0, 0], sizes = [16, 32], strides = [1, 1]} : vector<16x64xf32> to vector<16x32xf32>
    %58 = vector.extract_strided_slice %50 {offsets = [0, 0], sizes = [1, 32], strides = [1, 1]} : vector<1x64xf32> to vector<1x32xf32>
    "tpu.trace_start"() <{level = 10 : i32, message = "tj,sj->ts"}> : () -> ()
    %cst_24 = arith.constant dense<0.000000e+00> : vector<16x16xf32>
    %59 = tpu.matmul %53, %54, %cst_24 {dimension_numbers = #tpu.dot_dimension_numbers<[1], [1], [0], [0], [0, 0, 1, 0], [], []>} : vector<16x32xf32>, vector<16x32xf32>, vector<16x16xf32> -> vector<16x16xf32>
    "tpu.trace_stop"() : () -> ()
    %60 = arith.mulf %31, %59 : vector<16x16xf32>
    "tpu.trace_start"() <{level = 10 : i32, message = "tj,sj->ts"}> : () -> ()
    %cst_25 = arith.constant dense<0.000000e+00> : vector<16x16xf32>
    %61 = tpu.matmul %53, %55, %cst_25 {dimension_numbers = #tpu.dot_dimension_numbers<[1], [1], [0], [0], [0, 0, 1, 0], [], []>} : vector<16x32xf32>, vector<16x32xf32>, vector<16x16xf32> -> vector<16x16xf32>
    "tpu.trace_stop"() : () -> ()
    %62 = arith.mulf %31, %61 : vector<16x16xf32>
    %63 = arith.addf %34, %60 : vector<16x16xf32>
    %cst_26 = arith.constant dense<0.000000e+00> : vector<16x16xf32>
    %64 = tpu.matmul %60, %60, %cst_26 {dimension_numbers = #tpu.dot_dimension_numbers<[1], [0], [0], [1], [0, 0, 1, 1], [], []>} : vector<16x16xf32>, vector<16x16xf32>, vector<16x16xf32> -> vector<16x16xf32>
    %cst_27 = arith.constant dense<0.000000e+00> : vector<16x16xf32>
    %65 = tpu.matmul %63, %64, %cst_27 {dimension_numbers = #tpu.dot_dimension_numbers<[1], [0], [0], [1], [0, 0, 1, 1], [], []>} : vector<16x16xf32>, vector<16x16xf32>, vector<16x16xf32> -> vector<16x16xf32>
    %66 = arith.addf %63, %65 : vector<16x16xf32>
    %cst_28 = arith.constant dense<0.000000e+00> : vector<16x16xf32>
    %67 = tpu.matmul %64, %64, %cst_28 {dimension_numbers = #tpu.dot_dimension_numbers<[1], [0], [0], [1], [0, 0, 1, 1], [], []>} : vector<16x16xf32>, vector<16x16xf32>, vector<16x16xf32> -> vector<16x16xf32>
    %cst_29 = arith.constant dense<0.000000e+00> : vector<16x16xf32>
    %68 = tpu.matmul %66, %67, %cst_29 {dimension_numbers = #tpu.dot_dimension_numbers<[1], [0], [0], [1], [0, 0, 1, 1], [], []>} : vector<16x16xf32>, vector<16x16xf32>, vector<16x16xf32> -> vector<16x16xf32>
    %69 = arith.addf %66, %68 : vector<16x16xf32>
    %cst_30 = arith.constant dense<0.000000e+00> : vector<16x16xf32>
    %70 = tpu.matmul %67, %67, %cst_30 {dimension_numbers = #tpu.dot_dimension_numbers<[1], [0], [0], [1], [0, 0, 1, 1], [], []>} : vector<16x16xf32>, vector<16x16xf32>, vector<16x16xf32> -> vector<16x16xf32>
    %cst_31 = arith.constant dense<0.000000e+00> : vector<16x16xf32>
    %71 = tpu.matmul %69, %70, %cst_31 {dimension_numbers = #tpu.dot_dimension_numbers<[1], [0], [0], [1], [0, 0, 1, 1], [], []>} : vector<16x16xf32>, vector<16x16xf32>, vector<16x16xf32> -> vector<16x16xf32>
    %72 = arith.addf %69, %71 : vector<16x16xf32>
    "tpu.trace_start"() <{level = 10 : i32, message = "tj,ij->ti"}> : () -> ()
    %cst_32 = arith.constant dense<0.000000e+00> : vector<16x32xf32>
    %73 = tpu.matmul %53, %52, %cst_32 {dimension_numbers = #tpu.dot_dimension_numbers<[1], [1], [0], [0], [0, 0, 1, 0], [], []>} : vector<16x32xf32>, vector<32x32xf32>, vector<16x32xf32> -> vector<16x32xf32>
    "tpu.trace_stop"() : () -> ()
    %cst_33 = arith.constant dense<0.000000e+00> : vector<16x32xf32>
    %74 = tpu.matmul %62, %57, %cst_33 {dimension_numbers = #tpu.dot_dimension_numbers<[1], [0], [0], [1], [0, 0, 1, 1], [], []>} : vector<16x16xf32>, vector<16x32xf32>, vector<16x32xf32> -> vector<16x32xf32>
    %75 = arith.addf %73, %74 : vector<16x32xf32>
    %cst_34 = arith.constant dense<0.000000e+00> : vector<16x32xf32>
    %76 = tpu.matmul %72, %75, %cst_34 {dimension_numbers = #tpu.dot_dimension_numbers<[1], [0], [0], [1], [0, 0, 1, 1], [], []>} : vector<16x16xf32>, vector<16x32xf32>, vector<16x32xf32> -> vector<16x32xf32>
    "tpu.trace_start"() <{level = 10 : i32, message = "tj,sj->ts"}> : () -> ()
    %cst_35 = arith.constant dense<0.000000e+00> : vector<16x16xf32>
    %77 = tpu.matmul %56, %54, %cst_35 {dimension_numbers = #tpu.dot_dimension_numbers<[1], [1], [0], [0], [0, 0, 1, 0], [], []>} : vector<16x32xf32>, vector<16x32xf32>, vector<16x16xf32> -> vector<16x16xf32>
    "tpu.trace_stop"() : () -> ()
    %78 = arith.mulf %28, %77 : vector<16x16xf32>
    "tpu.trace_start"() <{level = 10 : i32, message = "tj,sj->ts"}> : () -> ()
    %cst_36 = arith.constant dense<0.000000e+00> : vector<16x16xf32>
    %79 = tpu.matmul %56, %55, %cst_36 {dimension_numbers = #tpu.dot_dimension_numbers<[1], [1], [0], [0], [0, 0, 1, 0], [], []>} : vector<16x32xf32>, vector<16x32xf32>, vector<16x16xf32> -> vector<16x16xf32>
    "tpu.trace_stop"() : () -> ()
    %80 = arith.mulf %28, %79 : vector<16x16xf32>
    "tpu.trace_start"() <{level = 10 : i32, message = "tj,ij->ti"}> : () -> ()
    %cst_37 = arith.constant dense<0.000000e+00> : vector<16x32xf32>
    %81 = tpu.matmul %56, %52, %cst_37 {dimension_numbers = #tpu.dot_dimension_numbers<[1], [1], [0], [0], [0, 0, 1, 0], [], []>} : vector<16x32xf32>, vector<32x32xf32>, vector<16x32xf32> -> vector<16x32xf32>
    "tpu.trace_stop"() : () -> ()
    %cst_38 = arith.constant dense<0.000000e+00> : vector<16x32xf32>
    %82 = tpu.matmul %78, %76, %cst_38 {dimension_numbers = #tpu.dot_dimension_numbers<[1], [0], [0], [1], [0, 0, 1, 1], [], []>} : vector<16x16xf32>, vector<16x32xf32>, vector<16x32xf32> -> vector<16x32xf32>
    %83 = arith.addf %81, %82 : vector<16x32xf32>
    %cst_39 = arith.constant dense<0.000000e+00> : vector<16x32xf32>
    %84 = tpu.matmul %80, %57, %cst_39 {dimension_numbers = #tpu.dot_dimension_numbers<[1], [0], [0], [1], [0, 0, 1, 1], [], []>} : vector<16x16xf32>, vector<16x32xf32>, vector<16x32xf32> -> vector<16x32xf32>
    %85 = arith.addf %83, %84 : vector<16x32xf32>
    %86 = vector.broadcast %58 : vector<1x32xf32> to vector<32x32xf32>
    %87 = arith.mulf %52, %86 : vector<32x32xf32>
    %88 = vector.broadcast %58 : vector<1x32xf32> to vector<16x32xf32>
    %89 = arith.mulf %54, %88 : vector<16x32xf32>
    "tpu.trace_start"() <{level = 10 : i32, message = "ti,tj->ij"}> : () -> ()
    %cst_40 = arith.constant dense<0.000000e+00> : vector<32x32xf32>
    %90 = tpu.matmul %76, %89, %cst_40 {dimension_numbers = #tpu.dot_dimension_numbers<[0], [0], [1], [1], [0, 1, 1, 1], [], []>} : vector<16x32xf32>, vector<16x32xf32>, vector<32x32xf32> -> vector<32x32xf32>
    "tpu.trace_stop"() : () -> ()
    %91 = arith.addf %87, %90 : vector<32x32xf32>
    %92 = vector.broadcast %58 : vector<1x32xf32> to vector<16x32xf32>
    %93 = arith.mulf %55, %92 : vector<16x32xf32>
    "tpu.trace_start"() <{level = 10 : i32, message = "ti,tj->ij"}> : () -> ()
    %cst_41 = arith.constant dense<0.000000e+00> : vector<32x32xf32>
    %94 = tpu.matmul %57, %93, %cst_41 {dimension_numbers = #tpu.dot_dimension_numbers<[0], [0], [1], [1], [0, 1, 1, 1], [], []>} : vector<16x32xf32>, vector<16x32xf32>, vector<32x32xf32> -> vector<32x32xf32>
    "tpu.trace_stop"() : () -> ()
    %95 = arith.addf %91, %94 : vector<32x32xf32>
    %c0_42 = arith.constant 0 : index
    %c0_43 = arith.constant 0 : index
    %c0_44 = arith.constant 0 : index
    %96 = vector.load %arg10[%c0_42, %c0_43, %c0_44] : memref<2x32x32xf32, #tpu.memory_space<vmem>>, vector<1x32x32xf32>
    %97 = vector.shape_cast %96 : vector<1x32x32xf32> to vector<32x32xf32>
    %98 = vector.shape_cast %95 : vector<32x32xf32> to vector<1x32x32xf32>
    tpu.vector_store %arg10[%c0_42, %c0_43, %c0_44], %98 {strides = array<i32>} : memref<2x32x32xf32, #tpu.memory_space<vmem>>, vector<1x32x32xf32>,
    %c1 = arith.constant 1 : index
    %c0_45 = arith.constant 0 : index
    %c0_46 = arith.constant 0 : index
    %99 = vector.load %arg10[%c1, %c0_45, %c0_46] : memref<2x32x32xf32, #tpu.memory_space<vmem>>, vector<1x32x32xf32>
    %100 = vector.shape_cast %99 : vector<1x32x32xf32> to vector<32x32xf32>
    %101 = vector.extract_strided_slice %38 {offsets = [0, 32], sizes = [16, 32], strides = [1, 1]} : vector<16x64xf32> to vector<16x32xf32>
    %102 = vector.extract_strided_slice %42 {offsets = [0, 32], sizes = [16, 32], strides = [1, 1]} : vector<16x64xf32> to vector<16x32xf32>
    %103 = vector.extract_strided_slice %46 {offsets = [0, 32], sizes = [16, 32], strides = [1, 1]} : vector<16x64xf32> to vector<16x32xf32>
    %104 = vector.extract_strided_slice %48 {offsets = [0, 32], sizes = [16, 32], strides = [1, 1]} : vector<16x64xf32> to vector<16x32xf32>
    %105 = vector.extract_strided_slice %17 {offsets = [0, 32], sizes = [16, 32], strides = [1, 1]} : vector<16x64xf32> to vector<16x32xf32>
    %106 = vector.extract_strided_slice %50 {offsets = [0, 32], sizes = [1, 32], strides = [1, 1]} : vector<1x64xf32> to vector<1x32xf32>
    "tpu.trace_start"() <{level = 10 : i32, message = "tj,sj->ts"}> : () -> ()
    %cst_47 = arith.constant dense<0.000000e+00> : vector<16x16xf32>
    %107 = tpu.matmul %101, %102, %cst_47 {dimension_numbers = #tpu.dot_dimension_numbers<[1], [1], [0], [0], [0, 0, 1, 0], [], []>} : vector<16x32xf32>, vector<16x32xf32>, vector<16x16xf32> -> vector<16x16xf32>
    "tpu.trace_stop"() : () -> ()
    %108 = arith.mulf %31, %107 : vector<16x16xf32>
    "tpu.trace_start"() <{level = 10 : i32, message = "tj,sj->ts"}> : () -> ()
    %cst_48 = arith.constant dense<0.000000e+00> : vector<16x16xf32>
    %109 = tpu.matmul %101, %103, %cst_48 {dimension_numbers = #tpu.dot_dimension_numbers<[1], [1], [0], [0], [0, 0, 1, 0], [], []>} : vector<16x32xf32>, vector<16x32xf32>, vector<16x16xf32> -> vector<16x16xf32>
    "tpu.trace_stop"() : () -> ()
    %110 = arith.mulf %31, %109 : vector<16x16xf32>
    %111 = arith.addf %34, %108 : vector<16x16xf32>
    %cst_49 = arith.constant dense<0.000000e+00> : vector<16x16xf32>
    %112 = tpu.matmul %108, %108, %cst_49 {dimension_numbers = #tpu.dot_dimension_numbers<[1], [0], [0], [1], [0, 0, 1, 1], [], []>} : vector<16x16xf32>, vector<16x16xf32>, vector<16x16xf32> -> vector<16x16xf32>
    %cst_50 = arith.constant dense<0.000000e+00> : vector<16x16xf32>
    %113 = tpu.matmul %111, %112, %cst_50 {dimension_numbers = #tpu.dot_dimension_numbers<[1], [0], [0], [1], [0, 0, 1, 1], [], []>} : vector<16x16xf32>, vector<16x16xf32>, vector<16x16xf32> -> vector<16x16xf32>
    %114 = arith.addf %111, %113 : vector<16x16xf32>
    %cst_51 = arith.constant dense<0.000000e+00> : vector<16x16xf32>
    %115 = tpu.matmul %112, %112, %cst_51 {dimension_numbers = #tpu.dot_dimension_numbers<[1], [0], [0], [1], [0, 0, 1, 1], [], []>} : vector<16x16xf32>, vector<16x16xf32>, vector<16x16xf32> -> vector<16x16xf32>
    %cst_52 = arith.constant dense<0.000000e+00> : vector<16x16xf32>
    %116 = tpu.matmul %114, %115, %cst_52 {dimension_numbers = #tpu.dot_dimension_numbers<[1], [0], [0], [1], [0, 0, 1, 1], [], []>} : vector<16x16xf32>, vector<16x16xf32>, vector<16x16xf32> -> vector<16x16xf32>
    %117 = arith.addf %114, %116 : vector<16x16xf32>
    %cst_53 = arith.constant dense<0.000000e+00> : vector<16x16xf32>
    %118 = tpu.matmul %115, %115, %cst_53 {dimension_numbers = #tpu.dot_dimension_numbers<[1], [0], [0], [1], [0, 0, 1, 1], [], []>} : vector<16x16xf32>, vector<16x16xf32>, vector<16x16xf32> -> vector<16x16xf32>
    %cst_54 = arith.constant dense<0.000000e+00> : vector<16x16xf32>
    %119 = tpu.matmul %117, %118, %cst_54 {dimension_numbers = #tpu.dot_dimension_numbers<[1], [0], [0], [1], [0, 0, 1, 1], [], []>} : vector<16x16xf32>, vector<16x16xf32>, vector<16x16xf32> -> vector<16x16xf32>
    %120 = arith.addf %117, %119 : vector<16x16xf32>
    "tpu.trace_start"() <{level = 10 : i32, message = "tj,ij->ti"}> : () -> ()
    %cst_55 = arith.constant dense<0.000000e+00> : vector<16x32xf32>
    %121 = tpu.matmul %101, %100, %cst_55 {dimension_numbers = #tpu.dot_dimension_numbers<[1], [1], [0], [0], [0, 0, 1, 0], [], []>} : vector<16x32xf32>, vector<32x32xf32>, vector<16x32xf32> -> vector<16x32xf32>
    "tpu.trace_stop"() : () -> ()
    %cst_56 = arith.constant dense<0.000000e+00> : vector<16x32xf32>
    %122 = tpu.matmul %110, %105, %cst_56 {dimension_numbers = #tpu.dot_dimension_numbers<[1], [0], [0], [1], [0, 0, 1, 1], [], []>} : vector<16x16xf32>, vector<16x32xf32>, vector<16x32xf32> -> vector<16x32xf32>
    %123 = arith.addf %121, %122 : vector<16x32xf32>
    %cst_57 = arith.constant dense<0.000000e+00> : vector<16x32xf32>
    %124 = tpu.matmul %120, %123, %cst_57 {dimension_numbers = #tpu.dot_dimension_numbers<[1], [0], [0], [1], [0, 0, 1, 1], [], []>} : vector<16x16xf32>, vector<16x32xf32>, vector<16x32xf32> -> vector<16x32xf32>
    "tpu.trace_start"() <{level = 10 : i32, message = "tj,sj->ts"}> : () -> ()
    %cst_58 = arith.constant dense<0.000000e+00> : vector<16x16xf32>
    %125 = tpu.matmul %104, %102, %cst_58 {dimension_numbers = #tpu.dot_dimension_numbers<[1], [1], [0], [0], [0, 0, 1, 0], [], []>} : vector<16x32xf32>, vector<16x32xf32>, vector<16x16xf32> -> vector<16x16xf32>
    "tpu.trace_stop"() : () -> ()
    %126 = arith.mulf %28, %125 : vector<16x16xf32>
    "tpu.trace_start"() <{level = 10 : i32, message = "tj,sj->ts"}> : () -> ()
    %cst_59 = arith.constant dense<0.000000e+00> : vector<16x16xf32>
    %127 = tpu.matmul %104, %103, %cst_59 {dimension_numbers = #tpu.dot_dimension_numbers<[1], [1], [0], [0], [0, 0, 1, 0], [], []>} : vector<16x32xf32>, vector<16x32xf32>, vector<16x16xf32> -> vector<16x16xf32>
    "tpu.trace_stop"() : () -> ()
    %128 = arith.mulf %28, %127 : vector<16x16xf32>
    "tpu.trace_start"() <{level = 10 : i32, message = "tj,ij->ti"}> : () -> ()
    %cst_60 = arith.constant dense<0.000000e+00> : vector<16x32xf32>
    %129 = tpu.matmul %104, %100, %cst_60 {dimension_numbers = #tpu.dot_dimension_numbers<[1], [1], [0], [0], [0, 0, 1, 0], [], []>} : vector<16x32xf32>, vector<32x32xf32>, vector<16x32xf32> -> vector<16x32xf32>
    "tpu.trace_stop"() : () -> ()
    %cst_61 = arith.constant dense<0.000000e+00> : vector<16x32xf32>
    %130 = tpu.matmul %126, %124, %cst_61 {dimension_numbers = #tpu.dot_dimension_numbers<[1], [0], [0], [1], [0, 0, 1, 1], [], []>} : vector<16x16xf32>, vector<16x32xf32>, vector<16x32xf32> -> vector<16x32xf32>
    %131 = arith.addf %129, %130 : vector<16x32xf32>
    %cst_62 = arith.constant dense<0.000000e+00> : vector<16x32xf32>
    %132 = tpu.matmul %128, %105, %cst_62 {dimension_numbers = #tpu.dot_dimension_numbers<[1], [0], [0], [1], [0, 0, 1, 1], [], []>} : vector<16x16xf32>, vector<16x32xf32>, vector<16x32xf32> -> vector<16x32xf32>
    %133 = arith.addf %131, %132 : vector<16x32xf32>
    %134 = vector.broadcast %106 : vector<1x32xf32> to vector<32x32xf32>
    %135 = arith.mulf %100, %134 : vector<32x32xf32>
    %136 = vector.broadcast %106 : vector<1x32xf32> to vector<16x32xf32>
    %137 = arith.mulf %102, %136 : vector<16x32xf32>
    "tpu.trace_start"() <{level = 10 : i32, message = "ti,tj->ij"}> : () -> ()
    %cst_63 = arith.constant dense<0.000000e+00> : vector<32x32xf32>
    %138 = tpu.matmul %124, %137, %cst_63 {dimension_numbers = #tpu.dot_dimension_numbers<[0], [0], [1], [1], [0, 1, 1, 1], [], []>} : vector<16x32xf32>, vector<16x32xf32>, vector<32x32xf32> -> vector<32x32xf32>
    "tpu.trace_stop"() : () -> ()
    %139 = arith.addf %135, %138 : vector<32x32xf32>
    %140 = vector.broadcast %106 : vector<1x32xf32> to vector<16x32xf32>
    %141 = arith.mulf %103, %140 : vector<16x32xf32>
    "tpu.trace_start"() <{level = 10 : i32, message = "ti,tj->ij"}> : () -> ()
    %cst_64 = arith.constant dense<0.000000e+00> : vector<32x32xf32>
    %142 = tpu.matmul %105, %141, %cst_64 {dimension_numbers = #tpu.dot_dimension_numbers<[0], [0], [1], [1], [0, 1, 1, 1], [], []>} : vector<16x32xf32>, vector<16x32xf32>, vector<32x32xf32> -> vector<32x32xf32>
    "tpu.trace_stop"() : () -> ()
    %143 = arith.addf %139, %142 : vector<32x32xf32>
    %c1_65 = arith.constant 1 : index
    %c0_66 = arith.constant 0 : index
    %c0_67 = arith.constant 0 : index
    %144 = vector.load %arg10[%c1_65, %c0_66, %c0_67] : memref<2x32x32xf32, #tpu.memory_space<vmem>>, vector<1x32x32xf32>
    %145 = vector.shape_cast %144 : vector<1x32x32xf32> to vector<32x32xf32>
    %146 = vector.shape_cast %143 : vector<32x32xf32> to vector<1x32x32xf32>
    tpu.vector_store %arg10[%c1_65, %c0_66, %c0_67], %146 {strides = array<i32>} : memref<2x32x32xf32, #tpu.memory_space<vmem>>, vector<1x32x32xf32>,
    %147 = tpu.concatenate %85, %133 in 1 : vector<16x32xf32>, vector<16x32xf32> -> vector<16x64xf32>
    %148 = arith.truncf %147 : vector<16x64xf32> to vector<16x64xbf16>
    %c0_68 = arith.constant 0 : index
    %c0_69 = arith.constant 0 : index
    %c0_70 = arith.constant 0 : index
    %149 = vector.load %arg9[%c0_68, %c0_69, %c0_70] : memref<1x16x64xbf16, #tpu.memory_space<vmem>>, vector<1x16x64xbf16>
    %150 = vector.shape_cast %149 : vector<1x16x64xbf16> to vector<16x64xbf16>
    %151 = vector.shape_cast %148 : vector<16x64xbf16> to vector<1x16x64xbf16>
    tpu.vector_store %arg9[%c0_68, %c0_69, %c0_70], %151 {strides = array<i32>} : memref<1x16x64xbf16, #tpu.memory_space<vmem>>, vector<1x16x64xbf16>,
    return
  }
  func.func @transform_0(%arg0: i32, %arg1: i32, %arg2: i32) -> (i32, i32, i32) {
    %c0_i32 = arith.constant 0 : i32
    return %arg0, %arg2, %arg1 : i32, i32, i32
  }
  func.func @transform_1(%arg0: i32, %arg1: i32, %arg2: i32) -> (i32, i32, i32) {
    %c0_i32 = arith.constant 0 : i32
    return %arg0, %arg2, %arg1 : i32, i32, i32
  }
  func.func @transform_2(%arg0: i32, %arg1: i32, %arg2: i32) -> (i32, i32, i32) {
    %c0_i32 = arith.constant 0 : i32
    return %arg0, %arg2, %arg1 : i32, i32, i32
  }
  func.func @transform_3(%arg0: i32, %arg1: i32, %arg2: i32) -> (i32, i32, i32) {
    %c0_i32 = arith.constant 0 : i32
    return %arg0, %arg2, %arg1 : i32, i32, i32
  }
  func.func @transform_4(%arg0: i32, %arg1: i32, %arg2: i32) -> (i32, i32, i32) {
    %c0_i32 = arith.constant 0 : i32
    return %arg0, %arg2, %arg1 : i32, i32, i32
  }
  func.func @transform_5(%arg0: i32, %arg1: i32, %arg2: i32) -> (i32, i32, i32) {
    %c0_i32 = arith.constant 0 : i32
    return %arg0, %arg2, %arg1 : i32, i32, i32
  }
  func.func @transform_6(%arg0: i32, %arg1: i32, %arg2: i32) -> (i32, i32, i32) {
    %c0_i32 = arith.constant 0 : i32
    return %arg0, %arg2, %arg1 : i32, i32, i32
  }
}

</mosaic_0001>

<llo_original>
// kernel: tpu_custom_call.1
$region0: #{tpu_custom_call.1}
  #allocation0 [shape = 'u32[]', space=smem, size = 0x4, offset = 0x4, fixed_abs, tag = 'smem constant byte address 0x4 - core index']
  #allocation1 [shape = 'u32[72,128]{1,0:T(1,128)}', space=vmem, size = 0x9000, scoped, tag = 'internal scratch']
  #allocation2 [shape = 'f32[2,32,32]{2,1,0:T(8,128)}', space=vmem, size = 0x8000, scoped, tag = 'scratch operand']
  %s0 = inlined_call_operand.hbm [shape: bf16[2,48,64], index: 0, kind: input, shape index: {}]
  %s1 = inlined_call_operand.hbm [shape: bf16[2,48,64], index: 1, kind: input, shape index: {}]
  %s2 = inlined_call_operand.hbm [shape: bf16[2,48,64], index: 2, kind: input, shape index: {}]
  %s3 = inlined_call_operand.hbm [shape: bf16[2,48,64], index: 3, kind: input, shape index: {}]
  %s4 = inlined_call_operand.hbm [shape: bf16[2,48,64], index: 4, kind: input, shape index: {}]
  %s5 = inlined_call_operand.hbm [shape: bf16[2,48,64], index: 5, kind: input, shape index: {}]
  %s6 = inlined_call_operand.hbm [shape: bf16[2,48,64], index: 6, kind: output, shape index: {}]
  %s7 = sld [smem:[#allocation0]]
  $region85: #{tpu_custom_call.1} parent=0
    _
  %s9 = ssub.s32 1, %s7
  %s10 = scalar_select 0, %s9, %s7
  $region1: #{tpu_custom_call.1} parent=0
    #allocation3 [shape = 'u8[8192]{0}', space=vmem, size = 0x2000, scoped, tag = 'input window, operand 0']
    #allocation4 [shape = 's32[2]{0}', space=sflag, size = 0x8, scoped, tag = 'scoped memory for tpu_custom_call.1']
    #allocation5 [shape = 's32[2]{0}', space=sflag, size = 0x8, scoped, tag = 'scoped memory for tpu_custom_call.1']
    #allocation6 [shape = 'u8[8192]{0}', space=vmem, size = 0x2000, scoped, tag = 'input window, operand 1']
    #allocation7 [shape = 's32[2]{0}', space=sflag, size = 0x8, scoped, tag = 'scoped memory for tpu_custom_call.1']
    #allocation8 [shape = 'u8[8192]{0}', space=vmem, size = 0x2000, scoped, tag = 'input window, operand 2']
    #allocation9 [shape = 'u8[8192]{0}', space=vmem, size = 0x2000, scoped, tag = 'input window, operand 3']
    #allocation10 [shape = 's32[2]{0}', space=sflag, size = 0x8, scoped, tag = 'scoped memory for tpu_custom_call.1']
    #allocation11 [shape = 'u8[8192]{0}', space=vmem, size = 0x2000, scoped, tag = 'input window, operand 4']
    #allocation12 [shape = 'u8[8192]{0}', space=vmem, size = 0x2000, scoped, tag = 'input window, operand 5']
    #allocation13 [shape = 's32[2]{0}', space=sflag, size = 0x8, scoped, tag = 'scoped memory for tpu_custom_call.1']
    #allocation14 [shape = 'u8[8192]{0}', space=vmem, size = 0x2000, scoped, tag = 'output window, operand 0']
    %11 = vsyncpa [#allocation4], 0
    %s12 = scalar_lea.sflag [#allocation4], 1
    %13 = vsyncpa %s12, 0
    %14 = vsyncpa [#allocation7], 0
    %s15 = scalar_lea.sflag [#allocation7], 1
    %16 = vsyncpa %s15, 0
    %17 = vsyncpa [#allocation10], 0
    %s18 = scalar_lea.sflag [#allocation10], 1
    %19 = vsyncpa %s18, 0
    %20 = vsyncpa [#allocation13], 0
    %s21 = scalar_lea.sflag [#allocation13], 1
    %22 = vsyncpa %s21, 0
    %23 = vsyncpa [#allocation5], 0
    %s24 = scalar_lea.sflag [#allocation5], 1
    %25 = vsyncpa %s24, 0
    loop: start=0, step=1, limit=8
    $region2: #{tpu_custom_call.1} parent=1 // loop_pre_header
      _
    $region3: #{tpu_custom_call.1} parent=1 // loop_header
      %s27 = sphi 0, %s31
      %p28 = scmp.ge.s32.totalorder %s27, 8
      %s34 = sphi 0, %s53
      %s35 = sphi 0, %s49
      %s36 = sphi 0, %s45
      %s37 = sphi 0, %s34
      %s38 = sphi 0, %s35
      %s39 = sphi 0, %s36
      %s40 = sphi 0, %s37
      %s41 = sphi 0, %s38
      %s42 = sphi 0, %s39
      %s60 = sphi 0, %s62
      %s63 = sphi 0, %s60
      %s64 = sphi 0, %s63
      %s80 = sphi 0, %s64
      %s90 = sphi 0, %s92
      %s93 = sphi 0, %s90
      %s94 = sphi 0, %s93
      %s110 = sphi 0, %s94
      %s120 = sphi 0, %s122
      %s123 = sphi 0, %s120
      %s124 = sphi 0, %s123
      %s140 = sphi 0, %s124
      %s150 = sphi 0, %s152
      %s153 = sphi 0, %s150
      %s154 = sphi 0, %s153
      %s170 = sphi 0, %s154
      %s180 = sphi 0, %s182
      %s183 = sphi 0, %s180
      %s184 = sphi 0, %s183
      %s200 = sphi 0, %s184
      %s210 = sphi 0, %s212
      %s213 = sphi 0, %s210
      %s214 = sphi 0, %s213
      %s230 = sphi 0, %s214
      %s240 = sphi 0, %s242
      %s243 = sphi 0, %s240
      %s244 = sphi 0, %s243
      %s260 = sphi 0, %s244
    $region4: #{tpu_custom_call.1} parent=1 // loop_header_branch
      %30 = sbr.rel (%p28) target = $region8
    $region5: #{tpu_custom_call.1} parent=1 // loop_body
      %s32 = ssub.s32 %s27, 1
      %s33 = ssub.s32 %s27, 2
      %s43 = sadd.s32 1, %s36
      %p44 = scmp.ge.s32.totalorder %s43, 3
      %s45 = scalar_select %p44, 0, %s43
      %s46 = sadd.s32 1, %s35
      %s47 = scalar_select %p44, %s46, %s35
      %p48 = scmp.ge.s32.totalorder %s47, 1
      %s49 = scalar_select %p48, 0, %s47
      %s50 = sadd.s32 1, %s34
      %s51 = scalar_select %p48, %s50, %s34
      %p52 = scmp.ge.s32.totalorder %s51, 2
      %s53 = scalar_select %p52, 0, %s51
      %s54 = ssub.s32 %s34, %s53
      %s55 = ssub.s32 %s36, %s45
      %s56 = sor.u32 %s54, %s55
      %s57 = ssub.s32 %s35, %s49
      %s58 = sor.u32 %s56, %s57
      %p59 = scmp.eq.s32.totalorder %s58, 0
      %s61 = sadd.s32 %s60, 1
      %s62 = scalar_select %p59, %s60, %s61
      %p65 = pneg %p59
      %p66 = scmp.eq.s32.totalorder %s27, 5
      %p67 = por %p65, %p66
      %p68 = scmp.ne.s32.totalorder %s60, %s63
      %p69 = scmp.eq.s32.totalorder %s27, 0
      %p70 = por %p68, %p69
      %p71 = scmp.ne.s32.totalorder %s60, %s63
      %p72 = scmp.eq.s32.totalorder %s32, 5
      %p73 = por %p71, %p72
      %p74 = scmp.ne.s32.totalorder %s63, %s64
      %p75 = scmp.eq.s32.totalorder %s32, 0
      %p76 = por %p74, %p75
      %p77 = scmp.ne.s32.totalorder %s63, %s64
      %p78 = scmp.eq.s32.totalorder %s33, 5
      %p79 = por %p77, %p78
      %p81 = scmp.ne.s32.totalorder %s64, %s80
      %p82 = scmp.eq.s32.totalorder %s33, 0
      %p83 = por %p81, %p82
      %s84 = ssub.s32 %s34, %s53
      %s85 = ssub.s32 %s36, %s45
      %s86 = sor.u32 %s84, %s85
      %s87 = ssub.s32 %s35, %s49
      %s88 = sor.u32 %s86, %s87
      %p89 = scmp.eq.s32.totalorder %s88, 0
      %s91 = sadd.s32 %s90, 1
      %s92 = scalar_select %p89, %s90, %s91
      %p95 = pneg %p89
      %p96 = scmp.eq.s32.totalorder %s27, 5
      %p97 = por %p95, %p96
      %p98 = scmp.ne.s32.totalorder %s90, %s93
      %p99 = scmp.eq.s32.totalorder %s27, 0
      %p100 = por %p98, %p99
      %p101 = scmp.ne.s32.totalorder %s90, %s93
      %p102 = scmp.eq.s32.totalorder %s32, 5
      %p103 = por %p101, %p102
      %p104 = scmp.ne.s32.totalorder %s93, %s94
      %p105 = scmp.eq.s32.totalorder %s32, 0
      %p106 = por %p104, %p105
      %p107 = scmp.ne.s32.totalorder %s93, %s94
      %p108 = scmp.eq.s32.totalorder %s33, 5
      %p109 = por %p107, %p108
      %p111 = scmp.ne.s32.totalorder %s94, %s110
      %p112 = scmp.eq.s32.totalorder %s33, 0
      %p113 = por %p111, %p112
      %s114 = ssub.s32 %s34, %s53
      %s115 = ssub.s32 %s36, %s45
      %s116 = sor.u32 %s114, %s115
      %s117 = ssub.s32 %s35, %s49
      %s118 = sor.u32 %s116, %s117
      %p119 = scmp.eq.s32.totalorder %s118, 0
      %s121 = sadd.s32 %s120, 1
      %s122 = scalar_select %p119, %s120, %s121
      %p125 = pneg %p119
      %p126 = scmp.eq.s32.totalorder %s27, 5
      %p127 = por %p125, %p126
      %p128 = scmp.ne.s32.totalorder %s120, %s123
      %p129 = scmp.eq.s32.totalorder %s27, 0
      %p130 = por %p128, %p129
      %p131 = scmp.ne.s32.totalorder %s120, %s123
      %p132 = scmp.eq.s32.totalorder %s32, 5
      %p133 = por %p131, %p132
      %p134 = scmp.ne.s32.totalorder %s123, %s124
      %p135 = scmp.eq.s32.totalorder %s32, 0
      %p136 = por %p134, %p135
      %p137 = scmp.ne.s32.totalorder %s123, %s124
      %p138 = scmp.eq.s32.totalorder %s33, 5
      %p139 = por %p137, %p138
      %p141 = scmp.ne.s32.totalorder %s124, %s140
      %p142 = scmp.eq.s32.totalorder %s33, 0
      %p143 = por %p141, %p142
      %s144 = ssub.s32 %s34, %s53
      %s145 = ssub.s32 %s36, %s45
      %s146 = sor.u32 %s144, %s145
      %s147 = ssub.s32 %s35, %s49
      %s148 = sor.u32 %s146, %s147
      %p149 = scmp.eq.s32.totalorder %s148, 0
      %s151 = sadd.s32 %s150, 1
      %s152 = scalar_select %p149, %s150, %s151
      %p155 = pneg %p149
      %p156 = scmp.eq.s32.totalorder %s27, 5
      %p157 = por %p155, %p156
      %p158 = scmp.ne.s32.totalorder %s150, %s153
      %p159 = scmp.eq.s32.totalorder %s27, 0
      %p160 = por %p158, %p159
      %p161 = scmp.ne.s32.totalorder %s150, %s153
      %p162 = scmp.eq.s32.totalorder %s32, 5
      %p163 = por %p161, %p162
      %p164 = scmp.ne.s32.totalorder %s153, %s154
      %p165 = scmp.eq.s32.totalorder %s32, 0
      %p166 = por %p164, %p165
      %p167 = scmp.ne.s32.totalorder %s153, %s154
      %p168 = scmp.eq.s32.totalorder %s33, 5
      %p169 = por %p167, %p168
      %p171 = scmp.ne.s32.totalorder %s154, %s170
      %p172 = scmp.eq.s32.totalorder %s33, 0
      %p173 = por %p171, %p172
      %s174 = ssub.s32 %s34, %s53
      %s175 = ssub.s32 %s36, %s45
      %s176 = sor.u32 %s174, %s175
      %s177 = ssub.s32 %s35, %s49
      %s178 = sor.u32 %s176, %s177
      %p179 = scmp.eq.s32.totalorder %s178, 0
      %s181 = sadd.s32 %s180, 1
      %s182 = scalar_select %p179, %s180, %s181
      %p185 = pneg %p179
      %p186 = scmp.eq.s32.totalorder %s27, 5
      %p187 = por %p185, %p186
      %p188 = scmp.ne.s32.totalorder %s180, %s183
      %p189 = scmp.eq.s32.totalorder %s27, 0
      %p190 = por %p188, %p189
      %p191 = scmp.ne.s32.totalorder %s180, %s183
      %p192 = scmp.eq.s32.totalorder %s32, 5
      %p193 = por %p191, %p192
      %p194 = scmp.ne.s32.totalorder %s183, %s184
      %p195 = scmp.eq.s32.totalorder %s32, 0
      %p196 = por %p194, %p195
      %p197 = scmp.ne.s32.totalorder %s183, %s184
      %p198 = scmp.eq.s32.totalorder %s33, 5
      %p199 = por %p197, %p198
      %p201 = scmp.ne.s32.totalorder %s184, %s200
      %p202 = scmp.eq.s32.totalorder %s33, 0
      %p203 = por %p201, %p202
      %s204 = ssub.s32 %s34, %s53
      %s205 = ssub.s32 %s36, %s45
      %s206 = sor.u32 %s204, %s205
      %s207 = ssub.s32 %s35, %s49
      %s208 = sor.u32 %s206, %s207
      %p209 = scmp.eq.s32.totalorder %s208, 0
      %s211 = sadd.s32 %s210, 1
      %s212 = scalar_select %p209, %s210, %s211
      %p215 = pneg %p209
      %p216 = scmp.eq.s32.totalorder %s27, 5
      %p217 = por %p215, %p216
      %p218 = scmp.ne.s32.totalorder %s210, %s213
      %p219 = scmp.eq.s32.totalorder %s27, 0
      %p220 = por %p218, %p219
      %p221 = scmp.ne.s32.totalorder %s210, %s213
      %p222 = scmp.eq.s32.totalorder %s32, 5
      %p223 = por %p221, %p222
      %p224 = scmp.ne.s32.totalorder %s213, %s214
      %p225 = scmp.eq.s32.totalorder %s32, 0
      %p226 = por %p224, %p225
      %p227 = scmp.ne.s32.totalorder %s213, %s214
      %p228 = scmp.eq.s32.totalorder %s33, 5
      %p229 = por %p227, %p228
      %p231 = scmp.ne.s32.totalorder %s214, %s230
      %p232 = scmp.eq.s32.totalorder %s33, 0
      %p233 = por %p231, %p232
      %s234 = ssub.s32 %s34, %s53
      %s235 = ssub.s32 %s36, %s45
      %s236 = sor.u32 %s234, %s235
      %s237 = ssub.s32 %s35, %s49
      %s238 = sor.u32 %s236, %s237
      %p239 = scmp.eq.s32.totalorder %s238, 0
      %s241 = sadd.s32 %s240, 1
      %s242 = scalar_select %p239, %s240, %s241
      %p245 = pneg %p239
      %p246 = scmp.eq.s32.totalorder %s27, 5
      %p247 = por %p245, %p246
      %p248 = scmp.ne.s32.totalorder %s240, %s243
      %p249 = scmp.eq.s32.totalorder %s27, 0
      %p250 = por %p248, %p249
      %p251 = scmp.ne.s32.totalorder %s240, %s243
      %p252 = scmp.eq.s32.totalorder %s32, 5
      %p253 = por %p251, %p252
      %p254 = scmp.ne.s32.totalorder %s243, %s244
      %p255 = scmp.eq.s32.totalorder %s32, 0
      %p256 = por %p254, %p255
      %p257 = scmp.ne.s32.totalorder %s243, %s244
      %p258 = scmp.eq.s32.totalorder %s33, 5
      %p259 = por %p257, %p258
      %p261 = scmp.ne.s32.totalorder %s244, %s260
      %p262 = scmp.eq.s32.totalorder %s33, 0
      %p263 = por %p261, %p262
      %p264 = scmp.le.s32.totalorder 1, %s27
      %p265 = scmp.lt.s32.totalorder %s27, 7
      %p266 = pnand %p264, %p265
      %p267 = pneg %p266
      // Predicated region
      $region9: #{tpu_custom_call.1} parent=5 // pred_check
        _
      $region10: #{tpu_custom_call.1} parent=5 // pred_check_branch
        %269 = sbr.rel (%p266) target = $region12
      $region11: #{tpu_custom_call.1} parent=5 // pred_region
        %s270 = ssub.s32 %s27, 1
      $region12: #{tpu_custom_call.1} parent=5 // pred_fallthru
        _
      %p271 = scmp.lt.s32.totalorder %s27, 6
      // Predicated region
      $region13: #{tpu_custom_call.1} parent=5 // pred_check
        %p272 = pneg %p271
      $region14: #{tpu_custom_call.1} parent=5 // pred_check_branch
        %274 = sbr.rel (%p272) target = $region16
      $region15: #{tpu_custom_call.1} parent=5 // pred_region
        // Predicated region
        $region17: #{tpu_custom_call.1} parent=15 // pred_check
          %p275 = pneg %p70
        $region18: #{tpu_custom_call.1} parent=15 // pred_check_branch
          %277 = sbr.rel (%p275) target = $region20
        $region19: #{tpu_custom_call.1} parent=15 // pred_region
          %s278 = sand.u32 %s60, 1
          %s279 = scalar_lea.sflag [#allocation4], %s278
          %s280 = sand.u32 %s60, 1
          %s281 = smul.addr %s280, 8
          %s282 = scalar_lea.vmem [#allocation3], %s281
          %s283 = smul.u32 2, %s36
          %285 = vsyncadd %s279, 0
          %s286 = sadd.s32 %s35, %s283
          %s287 = smul.addr %s34, 6
          %s288 = sadd.s32 %s286, %s287
          %s289 = smul.addr %s288, 4
          %s290 = scalar_lea.hbm %s0, %s289
          %s291 = sshll.u32 %s290, 4
          %s292 = int_to_ptr.hbm [resolvable:$true] %s291
          %s293 = sshll.u32 %s282, 4
          %s294 = int_to_ptr.vmem [resolvable:$true] %s293
          %299 = dma.hbm_to_vmem [thread:$0]  %s292, 128, %s294, %s279, 64, 64, 4
        $region20: #{tpu_custom_call.1} parent=15 // pred_fallthru
          _
        // Predicated region
        $region21: #{tpu_custom_call.1} parent=15 // pred_check
          %p300 = pneg %p100
        $region22: #{tpu_custom_call.1} parent=15 // pred_check_branch
          %302 = sbr.rel (%p300) target = $region24
        $region23: #{tpu_custom_call.1} parent=15 // pred_region
          %s303 = sand.u32 %s27, 1
          %s304 = scalar_lea.sflag [#allocation7], %s303
          %s305 = sand.u32 %s90, 1
          %s306 = smul.addr %s305, 8
          %s307 = scalar_lea.vmem [#allocation6], %s306
          %s308 = smul.u32 2, %s36
          %310 = vsyncadd %s304, 0
          %s311 = sadd.s32 %s35, %s308
          %s312 = smul.addr %s34, 6
          %s313 = sadd.s32 %s311, %s312
          %s314 = smul.addr %s313, 4
          %s315 = scalar_lea.hbm %s1, %s314
          %s316 = sshll.u32 %s315, 4
          %s317 = int_to_ptr.hbm [resolvable:$true] %s316
          %s318 = sshll.u32 %s307, 4
          %s319 = int_to_ptr.vmem [resolvable:$true] %s318
          %324 = dma.hbm_to_vmem [thread:$0]  %s317, 128, %s319, %s304, 64, 64, 4
        $region24: #{tpu_custom_call.1} parent=15 // pred_fallthru
          _
        // Predicated region
        $region25: #{tpu_custom_call.1} parent=15 // pred_check
          %p325 = pneg %p130
        $region26: #{tpu_custom_call.1} parent=15 // pred_check_branch
          %327 = sbr.rel (%p325) target = $region28
        $region27: #{tpu_custom_call.1} parent=15 // pred_region
          %s328 = sand.u32 %s27, 1
          %s329 = scalar_lea.sflag [#allocation7], %s328
          %s330 = sand.u32 %s120, 1
          %s331 = smul.addr %s330, 8
          %s332 = scalar_lea.vmem [#allocation8], %s331
          %s333 = smul.u32 2, %s36
          %335 = vsyncadd %s329, 0
          %s336 = sadd.s32 %s35, %s333
          %s337 = smul.addr %s34, 6
          %s338 = sadd.s32 %s336, %s337
          %s339 = smul.addr %s338, 4
          %s340 = scalar_lea.hbm %s2, %s339
          %s341 = sshll.u32 %s340, 4
          %s342 = int_to_ptr.hbm [resolvable:$true] %s341
          %s343 = sshll.u32 %s332, 4
          %s344 = int_to_ptr.vmem [resolvable:$true] %s343
          %349 = dma.hbm_to_vmem [thread:$0]  %s342, 128, %s344, %s329, 64, 64, 4
        $region28: #{tpu_custom_call.1} parent=15 // pred_fallthru
          _
        // Predicated region
        $region29: #{tpu_custom_call.1} parent=15 // pred_check
          %p350 = pneg %p160
        $region30: #{tpu_custom_call.1} parent=15 // pred_check_branch
          %352 = sbr.rel (%p350) target = $region32
        $region31: #{tpu_custom_call.1} parent=15 // pred_region
          %s353 = sand.u32 %s27, 1
          %s354 = scalar_lea.sflag [#allocation10], %s353
          %s355 = sand.u32 %s150, 1
          %s356 = smul.addr %s355, 8
          %s357 = scalar_lea.vmem [#allocation9], %s356
          %s358 = smul.u32 2, %s36
          %360 = vsyncadd %s354, 0
          %s361 = sadd.s32 %s35, %s358
          %s362 = smul.addr %s34, 6
          %s363 = sadd.s32 %s361, %s362
          %s364 = smul.addr %s363, 4
          %s365 = scalar_lea.hbm %s3, %s364
          %s366 = sshll.u32 %s365, 4
          %s367 = int_to_ptr.hbm [resolvable:$true] %s366
          %s368 = sshll.u32 %s357, 4
          %s369 = int_to_ptr.vmem [resolvable:$true] %s368
          %374 = dma.hbm_to_vmem [thread:$0]  %s367, 128, %s369, %s354, 64, 64, 4
        $region32: #{tpu_custom_call.1} parent=15 // pred_fallthru
          _
        // Predicated region
        $region33: #{tpu_custom_call.1} parent=15 // pred_check
          %p375 = pneg %p190
        $region34: #{tpu_custom_call.1} parent=15 // pred_check_branch
          %377 = sbr.rel (%p375) target = $region36
        $region35: #{tpu_custom_call.1} parent=15 // pred_region
          %s378 = sand.u32 %s27, 1
          %s379 = scalar_lea.sflag [#allocation10], %s378
          %s380 = sand.u32 %s180, 1
          %s381 = smul.addr %s380, 8
          %s382 = scalar_lea.vmem [#allocation11], %s381
          %s383 = smul.u32 2, %s36
          %385 = vsyncadd %s379, 0
          %s386 = sadd.s32 %s35, %s383
          %s387 = smul.addr %s34, 6
          %s388 = sadd.s32 %s386, %s387
          %s389 = smul.addr %s388, 4
          %s390 = scalar_lea.hbm %s4, %s389
          %s391 = sshll.u32 %s390, 4
          %s392 = int_to_ptr.hbm [resolvable:$true] %s391
          %s393 = sshll.u32 %s382, 4
          %s394 = int_to_ptr.vmem [resolvable:$true] %s393
          %399 = dma.hbm_to_vmem [thread:$0]  %s392, 128, %s394, %s379, 64, 64, 4
        $region36: #{tpu_custom_call.1} parent=15 // pred_fallthru
          _
        // Predicated region
        $region37: #{tpu_custom_call.1} parent=15 // pred_check
          %p400 = pneg %p220
        $region38: #{tpu_custom_call.1} parent=15 // pred_check_branch
          %402 = sbr.rel (%p400) target = $region40
        $region39: #{tpu_custom_call.1} parent=15 // pred_region
          %s403 = sand.u32 %s210, 1
          %s404 = scalar_lea.sflag [#allocation13], %s403
          %s405 = sand.u32 %s210, 1
          %s406 = smul.addr %s405, 8
          %s407 = scalar_lea.vmem [#allocation12], %s406
          %s408 = smul.u32 2, %s36
          %410 = vsyncadd %s404, 0
          %s411 = sadd.s32 %s35, %s408
          %s412 = smul.addr %s34, 6
          %s413 = sadd.s32 %s411, %s412
          %s414 = smul.addr %s413, 4
          %s415 = scalar_lea.hbm %s5, %s414
          %s416 = sshll.u32 %s415, 4
          %s417 = int_to_ptr.hbm [resolvable:$true] %s416
          %s418 = sshll.u32 %s407, 4
          %s419 = int_to_ptr.vmem [resolvable:$true] %s418
          %424 = dma.hbm_to_vmem [thread:$0]  %s417, 128, %s419, %s404, 64, 64, 4
        $region40: #{tpu_custom_call.1} parent=15 // pred_fallthru
          _
      $region16: #{tpu_custom_call.1} parent=5 // pred_fallthru
        _
      %p425 = scmp.le.s32.totalorder 1, %s27
      %p426 = scmp.lt.s32.totalorder %s27, 7
      %p427 = pnand %p425, %p426
      %p428 = pneg %p427
      // Predicated region
      $region41: #{tpu_custom_call.1} parent=5 // pred_check
        _
      $region42: #{tpu_custom_call.1} parent=5 // pred_check_branch
        %430 = sbr.rel (%p427) target = $region44
      $region43: #{tpu_custom_call.1} parent=5 // pred_region
        %s431 = ssub.s32 %s27, 1
        %s432 = sand.u32 %s63, 1
        %s433 = scalar_lea.sflag [#allocation4], %s432
        %s434 = sand.u32 %s63, 1
        %s435 = smul.addr %s434, 8
        %s436 = scalar_lea.vmem [#allocation3], %s435
        // Predicated region
        $region45: #{tpu_custom_call.1} parent=43 // pred_check
          %p437 = pneg %p76
        $region46: #{tpu_custom_call.1} parent=43 // pred_check_branch
          %439 = sbr.rel (%p437) target = $region48
        $region47: #{tpu_custom_call.1} parent=43 // pred_region
          %441 = dma.done %s433, 128
        $region48: #{tpu_custom_call.1} parent=43 // pred_fallthru
          _
        %s442 = sand.u32 %s32, 1
        %s443 = scalar_lea.sflag [#allocation7], %s442
        %s444 = sand.u32 %s93, 1
        %s445 = smul.addr %s444, 8
        %s446 = scalar_lea.vmem [#allocation6], %s445
        // Predicated region
        $region49: #{tpu_custom_call.1} parent=43 // pred_check
          %p447 = pneg %p106
        $region50: #{tpu_custom_call.1} parent=43 // pred_check_branch
          %449 = sbr.rel (%p447) target = $region52
        $region51: #{tpu_custom_call.1} parent=43 // pred_region
          %451 = dma.done %s443, 128
        $region52: #{tpu_custom_call.1} parent=43 // pred_fallthru
          _
        %s452 = sand.u32 %s32, 1
        %s453 = scalar_lea.sflag [#allocation7], %s452
        %s454 = sand.u32 %s123, 1
        %s455 = smul.addr %s454, 8
        %s456 = scalar_lea.vmem [#allocation8], %s455
        // Predicated region
        $region53: #{tpu_custom_call.1} parent=43 // pred_check
          %p457 = pneg %p136
        $region54: #{tpu_custom_call.1} parent=43 // pred_check_branch
          %459 = sbr.rel (%p457) target = $region56
        $region55: #{tpu_custom_call.1} parent=43 // pred_region
          %461 = dma.done %s453, 128
        $region56: #{tpu_custom_call.1} parent=43 // pred_fallthru
          _
        %s462 = sand.u32 %s32, 1
        %s463 = scalar_lea.sflag [#allocation10], %s462
        %s464 = sand.u32 %s153, 1
        %s465 = smul.addr %s464, 8
        %s466 = scalar_lea.vmem [#allocation9], %s465
        // Predicated region
        $region57: #{tpu_custom_call.1} parent=43 // pred_check
          %p467 = pneg %p166
        $region58: #{tpu_custom_call.1} parent=43 // pred_check_branch
          %469 = sbr.rel (%p467) target = $region60
        $region59: #{tpu_custom_call.1} parent=43 // pred_region
          %471 = dma.done %s463, 128
        $region60: #{tpu_custom_call.1} parent=43 // pred_fallthru
          _
        %s472 = sand.u32 %s32, 1
        %s473 = scalar_lea.sflag [#allocation10], %s472
        %s474 = sand.u32 %s183, 1
        %s475 = smul.addr %s474, 8
        %s476 = scalar_lea.vmem [#allocation11], %s475
        // Predicated region
        $region61: #{tpu_custom_call.1} parent=43 // pred_check
          %p477 = pneg %p196
        $region62: #{tpu_custom_call.1} parent=43 // pred_check_branch
          %479 = sbr.rel (%p477) target = $region64
        $region63: #{tpu_custom_call.1} parent=43 // pred_region
          %481 = dma.done %s473, 128
        $region64: #{tpu_custom_call.1} parent=43 // pred_fallthru
          _
        %s482 = sand.u32 %s213, 1
        %s483 = scalar_lea.sflag [#allocation13], %s482
        %s484 = sand.u32 %s213, 1
        %s485 = smul.addr %s484, 8
        %s486 = scalar_lea.vmem [#allocation12], %s485
        // Predicated region
        $region65: #{tpu_custom_call.1} parent=43 // pred_check
          %p487 = pneg %p226
        $region66: #{tpu_custom_call.1} parent=43 // pred_check_branch
          %489 = sbr.rel (%p487) target = $region68
        $region67: #{tpu_custom_call.1} parent=43 // pred_region
          %491 = dma.done %s483, 128
        $region68: #{tpu_custom_call.1} parent=43 // pred_fallthru
          _
        %s492 = sand.u32 %s63, 1
        %s493 = scalar_lea.sflag [#allocation4], %s492
        %s494 = sand.u32 %s63, 1
        %s495 = smul.addr %s494, 8
        %s496 = scalar_lea.vmem [#allocation3], %s495
        %p497 = pneg %p76
        %p498 = pneg %p73
        %s499 = sand.u32 %s32, 1
        %s500 = scalar_lea.sflag [#allocation7], %s499
        %s501 = sand.u32 %s93, 1
        %s502 = smul.addr %s501, 8
        %s503 = scalar_lea.vmem [#allocation6], %s502
        %p504 = pneg %p106
        %p505 = pneg %p103
        %s506 = sand.u32 %s32, 1
        %s507 = scalar_lea.sflag [#allocation7], %s506
        %s508 = sand.u32 %s123, 1
        %s509 = smul.addr %s508, 8
        %s510 = scalar_lea.vmem [#allocation8], %s509
        %p511 = pneg %p136
        %p512 = pneg %p133
        %s513 = sand.u32 %s32, 1
        %s514 = scalar_lea.sflag [#allocation10], %s513
        %s515 = sand.u32 %s153, 1
        %s516 = smul.addr %s515, 8
        %s517 = scalar_lea.vmem [#allocation9], %s516
        %p518 = pneg %p166
        %p519 = pneg %p163
        %s520 = sand.u32 %s32, 1
        %s521 = scalar_lea.sflag [#allocation10], %s520
        %s522 = sand.u32 %s183, 1
        %s523 = smul.addr %s522, 8
        %s524 = scalar_lea.vmem [#allocation11], %s523
        %p525 = pneg %p196
        %p526 = pneg %p193
        %s527 = sand.u32 %s213, 1
        %s528 = scalar_lea.sflag [#allocation13], %s527
        %s529 = sand.u32 %s213, 1
        %s530 = smul.addr %s529, 8
        %s531 = scalar_lea.vmem [#allocation12], %s530
        %p532 = pneg %p226
        %p533 = pneg %p223
        %p534 = pneg %p256
        %p535 = pneg %p253
        %s536 = sand.u32 %s243, 1
        %s537 = scalar_lea.sflag [#allocation5], %s536
        %s538 = sand.u32 %s243, 1
        %s539 = smul.addr %s538, 8
        %s540 = scalar_lea.vmem [#allocation14], %s539
        %s541 = smul.u32 2, %s39
        %s542 = smul.u32 2, %s39
        %s543 = smul.u32 2, %s39
        %s544 = smul.u32 2, %s39
        %s545 = smul.u32 2, %s39
        %s546 = smul.u32 2, %s39
        %s547 = smul.u32 2, %s39
        %p548 = scmp.eq.s32.totalorder %s39, 0
        // Predicated region
        $region69: #{tpu_custom_call.1} parent=43 // pred_check
          %p549 = pneg %p548
        $region70: #{tpu_custom_call.1} parent=43 // pred_check_branch
          %551 = sbr.rel (%p549) target = $region72
        $region71: #{tpu_custom_call.1} parent=43 // pred_region
          %vm552 = vcmask 261120
          %553 = vst.msk [vmem:[#allocation2] sm:$0xff] %vm552, 0.0
          %554 = vst.msk [vmem:[#allocation2 + $0x8] sm:$0xff] %vm552, 0.0
          %555 = vst.msk [vmem:[#allocation2 + $0x10] sm:$0xff] %vm552, 0.0
          %556 = vst.msk [vmem:[#allocation2 + $0x18] sm:$0xff] %vm552, 0.0
          %557 = vst.msk [vmem:[#allocation2 + $0x20] sm:$0xff] %vm552, 0.0
          %558 = vst.msk [vmem:[#allocation2 + $0x28] sm:$0xff] %vm552, 0.0
          %559 = vst.msk [vmem:[#allocation2 + $0x30] sm:$0xff] %vm552, 0.0
          %560 = vst.msk [vmem:[#allocation2 + $0x38] sm:$0xff] %vm552, 0.0
        $region72: #{tpu_custom_call.1} parent=43 // pred_fallthru
          _
        %v561 = vld [vmem:[%s446] sm:$0xf]
        %v562 = vld [vmem:[%s446 + $0x4] sm:$0xf]
        %v563 = vunpack.c.l.bf16 %v561
        %v564 = vunpack.c.l.bf16 %v562
        %v565 = vmul.f32 %v563, 1.442695
        %v566 = vpow.pop %v565
        %v567 = vmul.f32 %v564, 1.442695
        %v568 = vpow.pop %v567
        %v569 = vsub.f32 0.0, %v566
        %v570 = vsub.f32 0.0, %v568
        %v571 = vld [vmem:[%s436] sm:$0xf]
        %v572 = vld [vmem:[%s436 + $0x4] sm:$0xf]
        %v573 = vunpack.c.l.bf16 %v571
        %v574 = vunpack.c.l.bf16 %v572
        %v575 = vld [vmem:[%s456] sm:$0xf]
        %v576 = vld [vmem:[%s456 + $0x4] sm:$0xf]
        %v577 = vunpack.c.l.bf16 %v575
        %v578 = vunpack.c.l.bf16 %v576
        %v579 = vld [vmem:[%s466] sm:$0xf]
        %v580 = vld [vmem:[%s466 + $0x4] sm:$0xf]
        %v581 = vunpack.c.l.bf16 %v579
        %v582 = vunpack.c.l.bf16 %v580
        %v583 = vld [vmem:[%s476] sm:$0xf]
        %v584 = vld [vmem:[%s476 + $0x4] sm:$0xf]
        %v585 = vunpack.c.l.bf16 %v583
        %v586 = vunpack.c.l.bf16 %v584
        %v587 = vld [vmem:[%s486] sm:$0xf]
        %v588 = vld [vmem:[%s486 + $0x4] sm:$0xf]
        %v589 = vunpack.c.l.bf16 %v587
        %v590 = vunpack.c.l.bf16 %v588
        %v591 = vlaneseq
        %v592 = vshrl.u32 %v591, 7
        %v593 = vadd.s32 %v592, 8
        %v594 = vlaneseq
        %v595 = vand.u32 %v594, 127
        %vm596 = vcmp.le.s32.totalorder %v595, %v592
        %vm597 = vcmp.le.s32.totalorder %v595, %v593
        %v598 = vsel %vm596, 1, 0
        %v599 = vsel %vm597, 1, 0
        %v600 = vcvt.s32.f32 %v598
        %v601 = vcvt.s32.f32 %v599
        %vm602 = vcmp.lt.s32.totalorder %v595, %v592
        %vm603 = vcmp.lt.s32.totalorder %v595, %v593
        %v604 = vsel %vm602, 1, 0
        %v605 = vsel %vm603, 1, 0
        %v606 = vcvt.s32.f32 %v604
        %v607 = vcvt.s32.f32 %v605
        %vm608 = vcmp.eq.s32.totalorder %v595, %v592
        %vm609 = vcmp.eq.s32.totalorder %v595, %v593
        %v610 = vsel %vm608, 1, 0
        %v611 = vsel %vm609, 1, 0
        %v612 = vcvt.s32.f32 %v610
        %v613 = vcvt.s32.f32 %v611
        %vm614 = vcmask 130048
        %v616 = vsel %vm614, %v600, 0
        %v619 = vsel %vm614, %v601, 0
        %621 = vmatpush.msra.mxu0 0.0
        %622 = vmatpush.msra.mxu0 0.0
        %623 = vmatpush.msra.mxu0 0.0
        %624 = vmatpush.msra.mxu0 0.0
        %625 = vmatpush.msra.mxu0 0.0
        %626 = vmatpush.msra.mxu0 0.0
        %627 = vmatpush.msra.mxu0 0.0
        %628 = vmatpush.msra.mxu0 0.0
        %629 = vmatpush.msra.mxu0 0.0
        %630 = vmatpush.msra.mxu0 0.0
        %631 = vmatpush.msra.mxu0 0.0
        %632 = vmatpush.msra.mxu0 0.0
        %633 = vmatpush.msra.mxu0 0.0
        %634 = vmatpush.msra.mxu0 0.0
        %635 = vmatpush.msra.mxu0 %v570
        %636 = vmatpush.msra.mxu0 %v569
        %637 = vmatmul.f32.gmra.mxu0 %v616
        %v638 = vpop.f32.mrf.mxu0
        %v639 = vadd.f32 0.0, %v638
        %640 = vmatmul.f32.gmra.mxu0 %v619
        %v641 = vpop.f32.mrf.mxu0
        %v642 = vadd.f32 0.0, %v641
        %643 = vdwg.mxu0
        %v644 = vsub.f32 %v639, %v569
        %v645 = vsub.f32 %v642, %v570
        %v646 = vmul.f32 %v644, 1.442695
        %v647 = vpow.pop %v646
        %v648 = vmul.f32 %v645, 1.442695
        %v649 = vpow.pop %v648
        %v650 = vmul.f32 %v585, %v647
        %v651 = vmul.f32 %v586, %v649
        %v652 = vsub.f32 0.0, %v639
        %v653 = vsub.f32 0.0, %v642
        %v654 = vmul.f32 %v652, 1.442695
        %v655 = vpow.pop %v654
        %v656 = vmul.f32 %v653, 1.442695
        %v657 = vpow.pop %v656
        %v658 = vmul.f32 %v589, %v655
        %v659 = vmul.f32 %v590, %v657
        %v660 = vmul.f32 %v577, %v655
        %v661 = vmul.f32 %v578, %v657
        %v662 = vmul.f32 %v639, 1.442695
        %v663 = vpow.pop %v662
        %v664 = vmul.f32 %v642, 1.442695
        %v665 = vpow.pop %v664
        %v666 = vmul.f32 %v573, %v663
        %v667 = vmul.f32 %v574, %v665
        %v668 = vld [vmem:[#allocation2] sm:$0xff]
        %v669 = vld [vmem:[#allocation2 + $0x8] sm:$0xff]
        %v670 = vld [vmem:[#allocation2 + $0x10] sm:$0xff]
        %v671 = vld [vmem:[#allocation2 + $0x18] sm:$0xff]
        %vm672 = vcmask 261120
        %v674 = vsel %vm672, %v650, 0
        %v677 = vsel %vm672, %v651, 0
        %v680 = vsel %vm672, %v658, 0
        %v683 = vsel %vm672, %v659, 0
        %685 = vmatpush.xpose.msra.mxu0 0.0
        %686 = vmatpush.xpose.msra.mxu0 0.0
        %687 = vmatpush.xpose.msra.mxu0 0.0
        %688 = vmatpush.xpose.msra.mxu0 0.0
        %689 = vmatpush.xpose.msra.mxu0 0.0
        %690 = vmatpush.xpose.msra.mxu0 0.0
        %691 = vmatpush.xpose.msra.mxu0 0.0
        %692 = vmatpush.xpose.msra.mxu0 0.0
        %693 = vmatpush.xpose.msra.mxu0 0.0
        %694 = vmatpush.xpose.msra.mxu0 0.0
        %695 = vmatpush.xpose.msra.mxu0 0.0
        %696 = vmatpush.xpose.msra.mxu0 0.0
        %697 = vmatpush.xpose.msra.mxu0 0.0
        %698 = vmatpush.xpose.msra.mxu0 0.0
        %699 = vmatpush.xpose.msra.mxu0 %v683
        %700 = vmatpush.xpose.msra.mxu0 %v680
        %701 = vmatmul.f32.gmra.mxu0 %v674
        %v702 = vpop.f32.mrf.mxu0
        %v703 = vadd.f32 0.0, %v702
        %704 = vmatmul.f32.gmra.mxu0 %v677
        %v705 = vpop.f32.mrf.mxu0
        %v706 = vadd.f32 0.0, %v705
        %707 = vdwg.mxu0
        %v708 = vmul.f32 %v606, %v703
        %v709 = vmul.f32 %v607, %v706
        %v711 = vsel %vm672, %v660, 0
        %v714 = vsel %vm672, %v661, 0
        %716 = vmatpush.xpose.msra.mxu0 0.0
        %717 = vmatpush.xpose.msra.mxu0 0.0
        %718 = vmatpush.xpose.msra.mxu0 0.0
        %719 = vmatpush.xpose.msra.mxu0 0.0
        %720 = vmatpush.xpose.msra.mxu0 0.0
        %721 = vmatpush.xpose.msra.mxu0 0.0
        %722 = vmatpush.xpose.msra.mxu0 0.0
        %723 = vmatpush.xpose.msra.mxu0 0.0
        %724 = vmatpush.xpose.msra.mxu0 0.0
        %725 = vmatpush.xpose.msra.mxu0 0.0
        %726 = vmatpush.xpose.msra.mxu0 0.0
        %727 = vmatpush.xpose.msra.mxu0 0.0
        %728 = vmatpush.xpose.msra.mxu0 0.0
        %729 = vmatpush.xpose.msra.mxu0 0.0
        %730 = vmatpush.xpose.msra.mxu0 %v714
        %731 = vmatpush.xpose.msra.mxu0 %v711
        %732 = vmatmul.f32.gmra.mxu0 %v674
        %v733 = vpop.f32.mrf.mxu0
        %v734 = vadd.f32 0.0, %v733
        %735 = vmatmul.f32.gmra.mxu0 %v677
        %v736 = vpop.f32.mrf.mxu0
        %v737 = vadd.f32 0.0, %v736
        %738 = vdwg.mxu0
        %v739 = vmul.f32 %v606, %v734
        %v740 = vmul.f32 %v607, %v737
        %v741 = vadd.f32 %v612, %v708
        %v742 = vadd.f32 %v613, %v709
        %v744 = vsel %vm614, %v708, 0
        %v747 = vsel %vm614, %v709, 0
        %749 = vmatpush.msra.mxu0 0.0
        %750 = vmatpush.msra.mxu0 0.0
        %751 = vmatpush.msra.mxu0 0.0
        %752 = vmatpush.msra.mxu0 0.0
        %753 = vmatpush.msra.mxu0 0.0
        %754 = vmatpush.msra.mxu0 0.0
        %755 = vmatpush.msra.mxu0 0.0
        %756 = vmatpush.msra.mxu0 0.0
        %757 = vmatpush.msra.mxu0 0.0
        %758 = vmatpush.msra.mxu0 0.0
        %759 = vmatpush.msra.mxu0 0.0
        %760 = vmatpush.msra.mxu0 0.0
        %761 = vmatpush.msra.mxu0 0.0
        %762 = vmatpush.msra.mxu0 0.0
        %763 = vmatpush.msra.mxu0 %v709
        %764 = vmatpush.msra.mxu0 %v708
        %765 = vmatmul.f32.gmra.mxu0 %v744
        %v766 = vpop.f32.mrf.mxu0
        %v767 = vadd.f32 0.0, %v766
        %768 = vmatmul.f32.gmra.mxu0 %v747
        %v769 = vpop.f32.mrf.mxu0
        %v770 = vadd.f32 0.0, %v769
        %771 = vdwg.mxu0
        %v773 = vsel %vm614, %v741, 0
        %v776 = vsel %vm614, %v742, 0
        %778 = vmatpush.msra.mxu0 0.0
        %779 = vmatpush.msra.mxu0 0.0
        %780 = vmatpush.msra.mxu0 0.0
        %781 = vmatpush.msra.mxu0 0.0
        %782 = vmatpush.msra.mxu0 0.0
        %783 = vmatpush.msra.mxu0 0.0
        %784 = vmatpush.msra.mxu0 0.0
        %785 = vmatpush.msra.mxu0 0.0
        %786 = vmatpush.msra.mxu0 0.0
        %787 = vmatpush.msra.mxu0 0.0
        %788 = vmatpush.msra.mxu0 0.0
        %789 = vmatpush.msra.mxu0 0.0
        %790 = vmatpush.msra.mxu0 0.0
        %791 = vmatpush.msra.mxu0 0.0
        %792 = vmatpush.msra.mxu0 %v770
        %793 = vmatpush.msra.mxu0 %v767
        %794 = vmatmul.f32.gmra.mxu0 %v773
        %v795 = vpop.f32.mrf.mxu0
        %v796 = vadd.f32 0.0, %v795
        %797 = vmatmul.f32.gmra.mxu0 %v776
        %v798 = vpop.f32.mrf.mxu0
        %v799 = vadd.f32 0.0, %v798
        %800 = vdwg.mxu0
        %v801 = vadd.f32 %v741, %v796
        %v802 = vadd.f32 %v742, %v799
        %v804 = vsel %vm614, %v767, 0
        %v807 = vsel %vm614, %v770, 0
        %809 = vmatpush.msra.mxu0 0.0
        %810 = vmatpush.msra.mxu0 0.0
        %811 = vmatpush.msra.mxu0 0.0
        %812 = vmatpush.msra.mxu0 0.0
        %813 = vmatpush.msra.mxu0 0.0
        %814 = vmatpush.msra.mxu0 0.0
        %815 = vmatpush.msra.mxu0 0.0
        %816 = vmatpush.msra.mxu0 0.0
        %817 = vmatpush.msra.mxu0 0.0
        %818 = vmatpush.msra.mxu0 0.0
        %819 = vmatpush.msra.mxu0 0.0
        %820 = vmatpush.msra.mxu0 0.0
        %821 = vmatpush.msra.mxu0 0.0
        %822 = vmatpush.msra.mxu0 0.0
        %823 = vmatpush.msra.mxu0 %v770
        %824 = vmatpush.msra.mxu0 %v767
        %825 = vmatmul.f32.gmra.mxu0 %v804
        %v826 = vpop.f32.mrf.mxu0
        %v827 = vadd.f32 0.0, %v826
        %828 = vmatmul.f32.gmra.mxu0 %v807
        %v829 = vpop.f32.mrf.mxu0
        %v830 = vadd.f32 0.0, %v829
        %831 = vdwg.mxu0
        %v833 = vsel %vm614, %v801, 0
        %v836 = vsel %vm614, %v802, 0
        %838 = vmatpush.msra.mxu0 0.0
        %839 = vmatpush.msra.mxu0 0.0
        %840 = vmatpush.msra.mxu0 0.0
        %841 = vmatpush.msra.mxu0 0.0
        %842 = vmatpush.msra.mxu0 0.0
        %843 = vmatpush.msra.mxu0 0.0
        %844 = vmatpush.msra.mxu0 0.0
        %845 = vmatpush.msra.mxu0 0.0
        %846 = vmatpush.msra.mxu0 0.0
        %847 = vmatpush.msra.mxu0 0.0
        %848 = vmatpush.msra.mxu0 0.0
        %849 = vmatpush.msra.mxu0 0.0
        %850 = vmatpush.msra.mxu0 0.0
        %851 = vmatpush.msra.mxu0 0.0
        %852 = vmatpush.msra.mxu0 %v830
        %853 = vmatpush.msra.mxu0 %v827
        %854 = vmatmul.f32.gmra.mxu0 %v833
        %v855 = vpop.f32.mrf.mxu0
        %v856 = vadd.f32 0.0, %v855
        %857 = vmatmul.f32.gmra.mxu0 %v836
        %v858 = vpop.f32.mrf.mxu0
        %v859 = vadd.f32 0.0, %v858
        %860 = vdwg.mxu0
        %v861 = vadd.f32 %v801, %v856
        %v862 = vadd.f32 %v802, %v859
        %v864 = vsel %vm614, %v827, 0
        %v867 = vsel %vm614, %v830, 0
        %869 = vmatpush.msra.mxu0 0.0
        %870 = vmatpush.msra.mxu0 0.0
        %871 = vmatpush.msra.mxu0 0.0
        %872 = vmatpush.msra.mxu0 0.0
        %873 = vmatpush.msra.mxu0 0.0
        %874 = vmatpush.msra.mxu0 0.0
        %875 = vmatpush.msra.mxu0 0.0
        %876 = vmatpush.msra.mxu0 0.0
        %877 = vmatpush.msra.mxu0 0.0
        %878 = vmatpush.msra.mxu0 0.0
        %879 = vmatpush.msra.mxu0 0.0
        %880 = vmatpush.msra.mxu0 0.0
        %881 = vmatpush.msra.mxu0 0.0
        %882 = vmatpush.msra.mxu0 0.0
        %883 = vmatpush.msra.mxu0 %v830
        %884 = vmatpush.msra.mxu0 %v827
        %885 = vmatmul.f32.gmra.mxu0 %v864
        %v886 = vpop.f32.mrf.mxu0
        %v887 = vadd.f32 0.0, %v886
        %888 = vmatmul.f32.gmra.mxu0 %v867
        %v889 = vpop.f32.mrf.mxu0
        %v890 = vadd.f32 0.0, %v889
        %891 = vdwg.mxu0
        %v893 = vsel %vm614, %v861, 0
        %v896 = vsel %vm614, %v862, 0
        %898 = vmatpush.msra.mxu0 0.0
        %899 = vmatpush.msra.mxu0 0.0
        %900 = vmatpush.msra.mxu0 0.0
        %901 = vmatpush.msra.mxu0 0.0
        %902 = vmatpush.msra.mxu0 0.0
        %903 = vmatpush.msra.mxu0 0.0
        %904 = vmatpush.msra.mxu0 0.0
        %905 = vmatpush.msra.mxu0 0.0
        %906 = vmatpush.msra.mxu0 0.0
        %907 = vmatpush.msra.mxu0 0.0
        %908 = vmatpush.msra.mxu0 0.0
        %909 = vmatpush.msra.mxu0 0.0
        %910 = vmatpush.msra.mxu0 0.0
        %911 = vmatpush.msra.mxu0 0.0
        %912 = vmatpush.msra.mxu0 %v890
        %913 = vmatpush.msra.mxu0 %v887
        %914 = vmatmul.f32.gmra.mxu0 %v893
        %v915 = vpop.f32.mrf.mxu0
        %v916 = vadd.f32 0.0, %v915
        %917 = vmatmul.f32.gmra.mxu0 %v896
        %v918 = vpop.f32.mrf.mxu0
        %v919 = vadd.f32 0.0, %v918
        %920 = vdwg.mxu0
        %v921 = vadd.f32 %v861, %v916
        %v922 = vadd.f32 %v862, %v919
        %v924 = vsel %vm614, %v739, 0
        %v927 = vsel %vm614, %v740, 0
        %929 = vmatpush.msra.mxu0 0.0
        %930 = vmatpush.msra.mxu0 0.0
        %931 = vmatpush.msra.mxu0 0.0
        %932 = vmatpush.msra.mxu0 0.0
        %933 = vmatpush.msra.mxu0 0.0
        %934 = vmatpush.msra.mxu0 0.0
        %935 = vmatpush.msra.mxu0 0.0
        %936 = vmatpush.msra.mxu0 0.0
        %937 = vmatpush.msra.mxu0 0.0
        %938 = vmatpush.msra.mxu0 0.0
        %939 = vmatpush.msra.mxu0 0.0
        %940 = vmatpush.msra.mxu0 0.0
        %941 = vmatpush.msra.mxu0 0.0
        %942 = vmatpush.msra.mxu0 0.0
        %943 = vmatpush.msra.mxu0 %v582
        %944 = vmatpush.msra.mxu0 %v581
        %945 = vmatmul.f32.gmra.mxu0 %v924
        %v946 = vpop.f32.mrf.mxu0
        %v947 = vadd.f32 0.0, %v946
        %948 = vmatmul.f32.gmra.mxu0 %v927
        %v949 = vpop.f32.mrf.mxu0
        %v950 = vadd.f32 0.0, %v949
        %951 = vdwg.mxu0
        %v953 = vsel %vm672, %v668, 0
        %v956 = vsel %vm672, %v669, 0
        %v959 = vsel %vm672, %v670, 0
        %v962 = vsel %vm672, %v671, 0
        %964 = vmatpush.xpose.msra.mxu0 0.0
        %965 = vmatpush.xpose.msra.mxu0 0.0
        %966 = vmatpush.xpose.msra.mxu0 0.0
        %967 = vmatpush.xpose.msra.mxu0 0.0
        %968 = vmatpush.xpose.msra.mxu0 0.0
        %969 = vmatpush.xpose.msra.mxu0 0.0
        %970 = vmatpush.xpose.msra.mxu0 0.0
        %971 = vmatpush.xpose.msra.mxu0 0.0
        %972 = vmatpush.xpose.msra.mxu0 0.0
        %973 = vmatpush.xpose.msra.mxu0 0.0
        %974 = vmatpush.xpose.msra.mxu0 0.0
        %975 = vmatpush.xpose.msra.mxu0 0.0
        %976 = vmatpush.xpose.msra.mxu0 %v962
        %977 = vmatpush.xpose.msra.mxu0 %v959
        %978 = vmatpush.xpose.msra.mxu0 %v956
        %979 = vmatpush.xpose.msra.mxu0 %v953
        %980 = vmatmul.f32.gmra.mxu0 %v674
        %v981 = vpop.f32.mrf.mxu0
        %v982 = vadd.f32 %v947, %v981
        %983 = vmatmul.f32.gmra.mxu0 %v677
        %v984 = vpop.f32.mrf.mxu0
        %v985 = vadd.f32 %v950, %v984
        %986 = vdwg.mxu0
        %v988 = vsel %vm614, %v921, 0
        %v991 = vsel %vm614, %v922, 0
        %993 = vmatpush.msra.mxu0 0.0
        %994 = vmatpush.msra.mxu0 0.0
        %995 = vmatpush.msra.mxu0 0.0
        %996 = vmatpush.msra.mxu0 0.0
        %997 = vmatpush.msra.mxu0 0.0
        %998 = vmatpush.msra.mxu0 0.0
        %999 = vmatpush.msra.mxu0 0.0
        %1000 = vmatpush.msra.mxu0 0.0
        %1001 = vmatpush.msra.mxu0 0.0
        %1002 = vmatpush.msra.mxu0 0.0
        %1003 = vmatpush.msra.mxu0 0.0
        %1004 = vmatpush.msra.mxu0 0.0
        %1005 = vmatpush.msra.mxu0 0.0
        %1006 = vmatpush.msra.mxu0 0.0
        %1007 = vmatpush.msra.mxu0 %v985
        %1008 = vmatpush.msra.mxu0 %v982
        %1009 = vmatmul.f32.gmra.mxu0 %v988
        %v1010 = vpop.f32.mrf.mxu0
        %v1011 = vadd.f32 0.0, %v1010
        %1012 = vmatmul.f32.gmra.mxu0 %v991
        %v1013 = vpop.f32.mrf.mxu0
        %v1014 = vadd.f32 0.0, %v1013
        %1015 = vdwg.mxu0
        %v1017 = vsel %vm672, %v666, 0
        %v1020 = vsel %vm672, %v667, 0
        %1022 = vmatpush.xpose.msra.mxu0 0.0
        %1023 = vmatpush.xpose.msra.mxu0 0.0
        %1024 = vmatpush.xpose.msra.mxu0 0.0
        %1025 = vmatpush.xpose.msra.mxu0 0.0
        %1026 = vmatpush.xpose.msra.mxu0 0.0
        %1027 = vmatpush.xpose.msra.mxu0 0.0
        %1028 = vmatpush.xpose.msra.mxu0 0.0
        %1029 = vmatpush.xpose.msra.mxu0 0.0
        %1030 = vmatpush.xpose.msra.mxu0 0.0
        %1031 = vmatpush.xpose.msra.mxu0 0.0
        %1032 = vmatpush.xpose.msra.mxu0 0.0
        %1033 = vmatpush.xpose.msra.mxu0 0.0
        %1034 = vmatpush.xpose.msra.mxu0 0.0
        %1035 = vmatpush.xpose.msra.mxu0 0.0
        %1036 = vmatpush.xpose.msra.mxu0 %v683
        %1037 = vmatpush.xpose.msra.mxu0 %v680
        %1038 = vmatmul.f32.gmra.mxu0 %v1017
        %v1039 = vpop.f32.mrf.mxu0
        %v1040 = vadd.f32 0.0, %v1039
        %1041 = vmatmul.f32.gmra.mxu0 %v1020
        %v1042 = vpop.f32.mrf.mxu0
        %v1043 = vadd.f32 0.0, %v1042
        %1044 = vdwg.mxu0
        %v1045 = vmul.f32 %v600, %v1040
        %v1046 = vmul.f32 %v601, %v1043
        %1047 = vmatpush.xpose.msra.mxu0 0.0
        %1048 = vmatpush.xpose.msra.mxu0 0.0
        %1049 = vmatpush.xpose.msra.mxu0 0.0
        %1050 = vmatpush.xpose.msra.mxu0 0.0
        %1051 = vmatpush.xpose.msra.mxu0 0.0
        %1052 = vmatpush.xpose.msra.mxu0 0.0
        %1053 = vmatpush.xpose.msra.mxu0 0.0
        %1054 = vmatpush.xpose.msra.mxu0 0.0
        %1055 = vmatpush.xpose.msra.mxu0 0.0
        %1056 = vmatpush.xpose.msra.mxu0 0.0
        %1057 = vmatpush.xpose.msra.mxu0 0.0
        %1058 = vmatpush.xpose.msra.mxu0 0.0
        %1059 = vmatpush.xpose.msra.mxu0 0.0
        %1060 = vmatpush.xpose.msra.mxu0 0.0
        %1061 = vmatpush.xpose.msra.mxu0 %v714
        %1062 = vmatpush.xpose.msra.mxu0 %v711
        %1063 = vmatmul.f32.gmra.mxu0 %v1017
        %v1064 = vpop.f32.mrf.mxu0
        %v1065 = vadd.f32 0.0, %v1064
        %1066 = vmatmul.f32.gmra.mxu0 %v1020
        %v1067 = vpop.f32.mrf.mxu0
        %v1068 = vadd.f32 0.0, %v1067
        %1069 = vdwg.mxu0
        %v1070 = vmul.f32 %v600, %v1065
        %v1071 = vmul.f32 %v601, %v1068
        %v1073 = vsel %vm614, %v1045, 0
        %v1076 = vsel %vm614, %v1046, 0
        %1078 = vmatpush.msra.mxu0 0.0
        %1079 = vmatpush.msra.mxu0 0.0
        %1080 = vmatpush.msra.mxu0 0.0
        %1081 = vmatpush.msra.mxu0 0.0
        %1082 = vmatpush.msra.mxu0 0.0
        %1083 = vmatpush.msra.mxu0 0.0
        %1084 = vmatpush.msra.mxu0 0.0
        %1085 = vmatpush.msra.mxu0 0.0
        %1086 = vmatpush.msra.mxu0 0.0
        %1087 = vmatpush.msra.mxu0 0.0
        %1088 = vmatpush.msra.mxu0 0.0
        %1089 = vmatpush.msra.mxu0 0.0
        %1090 = vmatpush.msra.mxu0 0.0
        %1091 = vmatpush.msra.mxu0 0.0
        %1092 = vmatpush.msra.mxu0 %v1014
        %1093 = vmatpush.msra.mxu0 %v1011
        %1094 = vmatmul.f32.gmra.mxu0 %v1073
        %v1095 = vpop.f32.mrf.mxu0
        %v1096 = vadd.f32 0.0, %v1095
        %1097 = vmatmul.f32.gmra.mxu0 %v1076
        %v1098 = vpop.f32.mrf.mxu0
        %v1099 = vadd.f32 0.0, %v1098
        %1100 = vdwg.mxu0
        %1101 = vmatpush.xpose.msra.mxu0 0.0
        %1102 = vmatpush.xpose.msra.mxu0 0.0
        %1103 = vmatpush.xpose.msra.mxu0 0.0
        %1104 = vmatpush.xpose.msra.mxu0 0.0
        %1105 = vmatpush.xpose.msra.mxu0 0.0
        %1106 = vmatpush.xpose.msra.mxu0 0.0
        %1107 = vmatpush.xpose.msra.mxu0 0.0
        %1108 = vmatpush.xpose.msra.mxu0 0.0
        %1109 = vmatpush.xpose.msra.mxu0 0.0
        %1110 = vmatpush.xpose.msra.mxu0 0.0
        %1111 = vmatpush.xpose.msra.mxu0 0.0
        %1112 = vmatpush.xpose.msra.mxu0 0.0
        %1113 = vmatpush.xpose.msra.mxu0 %v962
        %1114 = vmatpush.xpose.msra.mxu0 %v959
        %1115 = vmatpush.xpose.msra.mxu0 %v956
        %1116 = vmatpush.xpose.msra.mxu0 %v953
        %1117 = vmatmul.f32.gmra.mxu0 %v1017
        %v1118 = vpop.f32.mrf.mxu0
        %v1119 = vadd.f32 %v1096, %v1118
        %1120 = vmatmul.f32.gmra.mxu0 %v1020
        %v1121 = vpop.f32.mrf.mxu0
        %v1122 = vadd.f32 %v1099, %v1121
        %1123 = vdwg.mxu0
        %v1125 = vsel %vm614, %v1070, 0
        %v1128 = vsel %vm614, %v1071, 0
        %1130 = vmatpush.msra.mxu0 0.0
        %1131 = vmatpush.msra.mxu0 0.0
        %1132 = vmatpush.msra.mxu0 0.0
        %1133 = vmatpush.msra.mxu0 0.0
        %1134 = vmatpush.msra.mxu0 0.0
        %1135 = vmatpush.msra.mxu0 0.0
        %1136 = vmatpush.msra.mxu0 0.0
        %1137 = vmatpush.msra.mxu0 0.0
        %1138 = vmatpush.msra.mxu0 0.0
        %1139 = vmatpush.msra.mxu0 0.0
        %1140 = vmatpush.msra.mxu0 0.0
        %1141 = vmatpush.msra.mxu0 0.0
        %1142 = vmatpush.msra.mxu0 0.0
        %1143 = vmatpush.msra.mxu0 0.0
        %1144 = vmatpush.msra.mxu0 %v582
        %1145 = vmatpush.msra.mxu0 %v581
        %1146 = vmatmul.f32.gmra.mxu0 %v1125
        %v1147 = vpop.f32.mrf.mxu0
        %v1148 = vadd.f32 0.0, %v1147
        %1149 = vmatmul.f32.gmra.mxu0 %v1128
        %v1150 = vpop.f32.mrf.mxu0
        %v1151 = vadd.f32 0.0, %v1150
        %1152 = vdwg.mxu0
        %v1153 = vadd.f32 %v1119, %v1148
        %v1154 = vadd.f32 %v1122, %v1151
        %v1155 = vperm.slane %v665, 7
        %v1156 = vmul.f32 %v668, %v1155
        %v1157 = vmul.f32 %v669, %v1155
        %v1158 = vmul.f32 %v670, %v1155
        %v1159 = vmul.f32 %v671, %v1155
        %v1160 = vmul.f32 %v658, %v1155
        %v1161 = vmul.f32 %v659, %v1155
        %1162 = vxpose.xlu0.b32.start [1/16] %v1011, 128
        %1163 = vxpose.xlu0.b32.cont [2/16] %v1014, 128
        %1164 = vxpose.xlu0.b32.cont [3/16] 0.0, 128
        %1165 = vxpose.xlu0.b32.cont [4/16] 0.0, 128
        %1166 = vxpose.xlu0.b32.cont [5/16] 0.0, 128
        %1167 = vxpose.xlu0.b32.cont [6/16] 0.0, 128
        %1168 = vxpose.xlu0.b32.cont [7/16] 0.0, 128
        %1169 = vxpose.xlu0.b32.cont [8/16] 0.0, 128
        %1170 = vxpose.xlu0.b32.cont [9/16] 0.0, 128
        %1171 = vxpose.xlu0.b32.cont [10/16] 0.0, 128
        %1172 = vxpose.xlu0.b32.cont [11/16] 0.0, 128
        %1173 = vxpose.xlu0.b32.cont [12/16] 0.0, 128
        %1174 = vxpose.xlu0.b32.cont [13/16] 0.0, 128
        %1175 = vxpose.xlu0.b32.cont [14/16] 0.0, 128
        %1176 = vxpose.xlu0.b32.cont [15/16] 0.0, 128
        %1177 = vxpose.xlu0.b32.end [16/16] 0.0, 128
        %v1178 = vpop.trf.xlu0
        %v1179 = vpop.trf.xlu0
        %v1180 = vpop.trf.xlu0
        %v1181 = vpop.trf.xlu0
        %v1182 = vpop.trf.xlu0
        %v1183 = vpop.trf.xlu0
        %v1184 = vpop.trf.xlu0
        %v1185 = vpop.trf.xlu0
        %v1186 = vpop.trf.xlu0
        %v1187 = vpop.trf.xlu0
        %v1188 = vpop.trf.xlu0
        %v1189 = vpop.trf.xlu0
        %v1190 = vpop.trf.xlu0
        %v1191 = vpop.trf.xlu0
        %v1192 = vpop.trf.xlu0
        %v1193 = vpop.trf.xlu0
        %v1195 = vsel %vm614, %v1178, 0
        %v1198 = vsel %vm614, %v1179, 0
        %v1201 = vsel %vm614, %v1180, 0
        %v1204 = vsel %vm614, %v1181, 0
        %1206 = vmatpush.msra.mxu0 0.0
        %1207 = vmatpush.msra.mxu0 0.0
        %1208 = vmatpush.msra.mxu0 0.0
        %1209 = vmatpush.msra.mxu0 0.0
        %1210 = vmatpush.msra.mxu0 0.0
        %1211 = vmatpush.msra.mxu0 0.0
        %1212 = vmatpush.msra.mxu0 0.0
        %1213 = vmatpush.msra.mxu0 0.0
        %1214 = vmatpush.msra.mxu0 0.0
        %1215 = vmatpush.msra.mxu0 0.0
        %1216 = vmatpush.msra.mxu0 0.0
        %1217 = vmatpush.msra.mxu0 0.0
        %1218 = vmatpush.msra.mxu0 0.0
        %1219 = vmatpush.msra.mxu0 0.0
        %1220 = vmatpush.msra.mxu0 %v1161
        %1221 = vmatpush.msra.mxu0 %v1160
        %1222 = vmatmul.f32.gmra.mxu0 %v1195
        %v1223 = vpop.f32.mrf.mxu0
        %v1224 = vadd.f32 0.0, %v1223
        %1225 = vmatmul.f32.gmra.mxu0 %v1198
        %v1226 = vpop.f32.mrf.mxu0
        %v1227 = vadd.f32 0.0, %v1226
        %1228 = vmatmul.f32.gmra.mxu0 %v1201
        %v1229 = vpop.f32.mrf.mxu0
        %v1230 = vadd.f32 0.0, %v1229
        %1231 = vmatmul.f32.gmra.mxu0 %v1204
        %v1232 = vpop.f32.mrf.mxu0
        %v1233 = vadd.f32 0.0, %v1232
        %1234 = vdwg.mxu0
        %v1235 = vadd.f32 %v1156, %v1224
        %v1236 = vadd.f32 %v1157, %v1227
        %v1237 = vadd.f32 %v1158, %v1230
        %v1238 = vadd.f32 %v1159, %v1233
        %v1239 = vmul.f32 %v660, %v1155
        %v1240 = vmul.f32 %v661, %v1155
        %1241 = vxpose.xlu0.b32.start [1/16] %v581, 128
        %1242 = vxpose.xlu0.b32.cont [2/16] %v582, 128
        %1243 = vxpose.xlu0.b32.cont [3/16] 0.0, 128
        %1244 = vxpose.xlu0.b32.cont [4/16] 0.0, 128
        %1245 = vxpose.xlu0.b32.cont [5/16] 0.0, 128
        %1246 = vxpose.xlu0.b32.cont [6/16] 0.0, 128
        %1247 = vxpose.xlu0.b32.cont [7/16] 0.0, 128
        %1248 = vxpose.xlu0.b32.cont [8/16] 0.0, 128
        %1249 = vxpose.xlu0.b32.cont [9/16] 0.0, 128
        %1250 = vxpose.xlu0.b32.cont [10/16] 0.0, 128
        %1251 = vxpose.xlu0.b32.cont [11/16] 0.0, 128
        %1252 = vxpose.xlu0.b32.cont [12/16] 0.0, 128
        %1253 = vxpose.xlu0.b32.cont [13/16] 0.0, 128
        %1254 = vxpose.xlu0.b32.cont [14/16] 0.0, 128
        %1255 = vxpose.xlu0.b32.cont [15/16] 0.0, 128
        %1256 = vxpose.xlu0.b32.end [16/16] 0.0, 128
        %v1257 = vpop.trf.xlu0
        %v1258 = vpop.trf.xlu0
        %v1259 = vpop.trf.xlu0
        %v1260 = vpop.trf.xlu0
        %v1261 = vpop.trf.xlu0
        %v1262 = vpop.trf.xlu0
        %v1263 = vpop.trf.xlu0
        %v1264 = vpop.trf.xlu0
        %v1265 = vpop.trf.xlu0
        %v1266 = vpop.trf.xlu0
        %v1267 = vpop.trf.xlu0
        %v1268 = vpop.trf.xlu0
        %v1269 = vpop.trf.xlu0
        %v1270 = vpop.trf.xlu0
        %v1271 = vpop.trf.xlu0
        %v1272 = vpop.trf.xlu0
        %v1274 = vsel %vm614, %v1257, 0
        %v1277 = vsel %vm614, %v1258, 0
        %v1280 = vsel %vm614, %v1259, 0
        %v1283 = vsel %vm614, %v1260, 0
        %1285 = vmatpush.msra.mxu0 0.0
        %1286 = vmatpush.msra.mxu0 0.0
        %1287 = vmatpush.msra.mxu0 0.0
        %1288 = vmatpush.msra.mxu0 0.0
        %1289 = vmatpush.msra.mxu0 0.0
        %1290 = vmatpush.msra.mxu0 0.0
        %1291 = vmatpush.msra.mxu0 0.0
        %1292 = vmatpush.msra.mxu0 0.0
        %1293 = vmatpush.msra.mxu0 0.0
        %1294 = vmatpush.msra.mxu0 0.0
        %1295 = vmatpush.msra.mxu0 0.0
        %1296 = vmatpush.msra.mxu0 0.0
        %1297 = vmatpush.msra.mxu0 0.0
        %1298 = vmatpush.msra.mxu0 0.0
        %1299 = vmatpush.msra.mxu0 %v1240
        %1300 = vmatpush.msra.mxu0 %v1239
        %1301 = vmatmul.f32.gmra.mxu0 %v1274
        %v1302 = vpop.f32.mrf.mxu0
        %v1303 = vadd.f32 0.0, %v1302
        %1304 = vmatmul.f32.gmra.mxu0 %v1277
        %v1305 = vpop.f32.mrf.mxu0
        %v1306 = vadd.f32 0.0, %v1305
        %1307 = vmatmul.f32.gmra.mxu0 %v1280
        %v1308 = vpop.f32.mrf.mxu0
        %v1309 = vadd.f32 0.0, %v1308
        %1310 = vmatmul.f32.gmra.mxu0 %v1283
        %v1311 = vpop.f32.mrf.mxu0
        %v1312 = vadd.f32 0.0, %v1311
        %1313 = vdwg.mxu0
        %v1314 = vadd.f32 %v1235, %v1303
        %v1315 = vadd.f32 %v1236, %v1306
        %v1316 = vadd.f32 %v1237, %v1309
        %v1317 = vadd.f32 %v1238, %v1312
        %1318 = vst.msk [vmem:[#allocation2] sm:$0xff] %vm672, %v1314
        %1319 = vst.msk [vmem:[#allocation2 + $0x8] sm:$0xff] %vm672, %v1315
        %1320 = vst.msk [vmem:[#allocation2 + $0x10] sm:$0xff] %vm672, %v1316
        %1321 = vst.msk [vmem:[#allocation2 + $0x18] sm:$0xff] %vm672, %v1317
        %s1322 = scalar_lea.vmem [#allocation2], 32
        %v1323 = vld [vmem:[%s1322] sm:$0xff]
        %v1324 = vld [vmem:[%s1322 + $0x8] sm:$0xff]
        %v1325 = vld [vmem:[%s1322 + $0x10] sm:$0xff]
        %v1326 = vld [vmem:[%s1322 + $0x18] sm:$0xff]
        %1327 = vrot.lane.b32.xlu0 %v650, 96
        %v1328 = vpop.permute.xlu0 %1327
        %1329 = vrot.lane.b32.xlu0 %v651, 96
        %v1330 = vpop.permute.xlu0 %1329
        %1331 = vrot.lane.b32.xlu0 %v658, 96
        %v1332 = vpop.permute.xlu0 %1331
        %1333 = vrot.lane.b32.xlu0 %v659, 96
        %v1334 = vpop.permute.xlu0 %1333
        %v1335 = vsel %vm672, %v1328, 0
        %v1337 = vsel %vm672, %v1330, 0
        %v1339 = vsel %vm672, %v1332, 0
        %v1341 = vsel %vm672, %v1334, 0
        %1343 = vmatpush.xpose.msra.mxu0 0.0
        %1344 = vmatpush.xpose.msra.mxu0 0.0
        %1345 = vmatpush.xpose.msra.mxu0 0.0
        %1346 = vmatpush.xpose.msra.mxu0 0.0
        %1347 = vmatpush.xpose.msra.mxu0 0.0
        %1348 = vmatpush.xpose.msra.mxu0 0.0
        %1349 = vmatpush.xpose.msra.mxu0 0.0
        %1350 = vmatpush.xpose.msra.mxu0 0.0
        %1351 = vmatpush.xpose.msra.mxu0 0.0
        %1352 = vmatpush.xpose.msra.mxu0 0.0
        %1353 = vmatpush.xpose.msra.mxu0 0.0
        %1354 = vmatpush.xpose.msra.mxu0 0.0
        %1355 = vmatpush.xpose.msra.mxu0 0.0
        %1356 = vmatpush.xpose.msra.mxu0 0.0
        %1357 = vmatpush.xpose.msra.mxu0 %v1341
        %1358 = vmatpush.xpose.msra.mxu0 %v1339
        %1359 = vmatmul.f32.gmra.mxu0 %v1335
        %v1360 = vpop.f32.mrf.mxu0
        %v1361 = vadd.f32 0.0, %v1360
        %1362 = vmatmul.f32.gmra.mxu0 %v1337
        %v1363 = vpop.f32.mrf.mxu0
        %v1364 = vadd.f32 0.0, %v1363
        %1365 = vdwg.mxu0
        %v1366 = vmul.f32 %v606, %v1361
        %v1367 = vmul.f32 %v607, %v1364
        %1368 = vrot.lane.b32.xlu0 %v660, 96
        %v1369 = vpop.permute.xlu0 %1368
        %1370 = vrot.lane.b32.xlu0 %v661, 96
        %v1371 = vpop.permute.xlu0 %1370
        %v1372 = vsel %vm672, %v1369, 0
        %v1374 = vsel %vm672, %v1371, 0
        %1376 = vmatpush.xpose.msra.mxu0 0.0
        %1377 = vmatpush.xpose.msra.mxu0 0.0
        %1378 = vmatpush.xpose.msra.mxu0 0.0
        %1379 = vmatpush.xpose.msra.mxu0 0.0
        %1380 = vmatpush.xpose.msra.mxu0 0.0
        %1381 = vmatpush.xpose.msra.mxu0 0.0
        %1382 = vmatpush.xpose.msra.mxu0 0.0
        %1383 = vmatpush.xpose.msra.mxu0 0.0
        %1384 = vmatpush.xpose.msra.mxu0 0.0
        %1385 = vmatpush.xpose.msra.mxu0 0.0
        %1386 = vmatpush.xpose.msra.mxu0 0.0
        %1387 = vmatpush.xpose.msra.mxu0 0.0
        %1388 = vmatpush.xpose.msra.mxu0 0.0
        %1389 = vmatpush.xpose.msra.mxu0 0.0
        %1390 = vmatpush.xpose.msra.mxu0 %v1374
        %1391 = vmatpush.xpose.msra.mxu0 %v1372
        %1392 = vmatmul.f32.gmra.mxu0 %v1335
        %v1393 = vpop.f32.mrf.mxu0
        %v1394 = vadd.f32 0.0, %v1393
        %1395 = vmatmul.f32.gmra.mxu0 %v1337
        %v1396 = vpop.f32.mrf.mxu0
        %v1397 = vadd.f32 0.0, %v1396
        %1398 = vdwg.mxu0
        %v1399 = vmul.f32 %v606, %v1394
        %v1400 = vmul.f32 %v607, %v1397
        %v1401 = vadd.f32 %v612, %v1366
        %v1402 = vadd.f32 %v613, %v1367
        %v1404 = vsel %vm614, %v1366, 0
        %v1407 = vsel %vm614, %v1367, 0
        %1409 = vmatpush.msra.mxu0 0.0
        %1410 = vmatpush.msra.mxu0 0.0
        %1411 = vmatpush.msra.mxu0 0.0
        %1412 = vmatpush.msra.mxu0 0.0
        %1413 = vmatpush.msra.mxu0 0.0
        %1414 = vmatpush.msra.mxu0 0.0
        %1415 = vmatpush.msra.mxu0 0.0
        %1416 = vmatpush.msra.mxu0 0.0
        %1417 = vmatpush.msra.mxu0 0.0
        %1418 = vmatpush.msra.mxu0 0.0
        %1419 = vmatpush.msra.mxu0 0.0
        %1420 = vmatpush.msra.mxu0 0.0
        %1421 = vmatpush.msra.mxu0 0.0
        %1422 = vmatpush.msra.mxu0 0.0
        %1423 = vmatpush.msra.mxu0 %v1367
        %1424 = vmatpush.msra.mxu0 %v1366
        %1425 = vmatmul.f32.gmra.mxu0 %v1404
        %v1426 = vpop.f32.mrf.mxu0
        %v1427 = vadd.f32 0.0, %v1426
        %1428 = vmatmul.f32.gmra.mxu0 %v1407
        %v1429 = vpop.f32.mrf.mxu0
        %v1430 = vadd.f32 0.0, %v1429
        %1431 = vdwg.mxu0
        %v1433 = vsel %vm614, %v1401, 0
        %v1436 = vsel %vm614, %v1402, 0
        %1438 = vmatpush.msra.mxu0 0.0
        %1439 = vmatpush.msra.mxu0 0.0
        %1440 = vmatpush.msra.mxu0 0.0
        %1441 = vmatpush.msra.mxu0 0.0
        %1442 = vmatpush.msra.mxu0 0.0
        %1443 = vmatpush.msra.mxu0 0.0
        %1444 = vmatpush.msra.mxu0 0.0
        %1445 = vmatpush.msra.mxu0 0.0
        %1446 = vmatpush.msra.mxu0 0.0
        %1447 = vmatpush.msra.mxu0 0.0
        %1448 = vmatpush.msra.mxu0 0.0
        %1449 = vmatpush.msra.mxu0 0.0
        %1450 = vmatpush.msra.mxu0 0.0
        %1451 = vmatpush.msra.mxu0 0.0
        %1452 = vmatpush.msra.mxu0 %v1430
        %1453 = vmatpush.msra.mxu0 %v1427
        %1454 = vmatmul.f32.gmra.mxu0 %v1433
        %v1455 = vpop.f32.mrf.mxu0
        %v1456 = vadd.f32 0.0, %v1455
        %1457 = vmatmul.f32.gmra.mxu0 %v1436
        %v1458 = vpop.f32.mrf.mxu0
        %v1459 = vadd.f32 0.0, %v1458
        %1460 = vdwg.mxu0
        %v1461 = vadd.f32 %v1401, %v1456
        %v1462 = vadd.f32 %v1402, %v1459
        %v1464 = vsel %vm614, %v1427, 0
        %v1467 = vsel %vm614, %v1430, 0
        %1469 = vmatpush.msra.mxu0 0.0
        %1470 = vmatpush.msra.mxu0 0.0
        %1471 = vmatpush.msra.mxu0 0.0
        %1472 = vmatpush.msra.mxu0 0.0
        %1473 = vmatpush.msra.mxu0 0.0
        %1474 = vmatpush.msra.mxu0 0.0
        %1475 = vmatpush.msra.mxu0 0.0
        %1476 = vmatpush.msra.mxu0 0.0
        %1477 = vmatpush.msra.mxu0 0.0
        %1478 = vmatpush.msra.mxu0 0.0
        %1479 = vmatpush.msra.mxu0 0.0
        %1480 = vmatpush.msra.mxu0 0.0
        %1481 = vmatpush.msra.mxu0 0.0
        %1482 = vmatpush.msra.mxu0 0.0
        %1483 = vmatpush.msra.mxu0 %v1430
        %1484 = vmatpush.msra.mxu0 %v1427
        %1485 = vmatmul.f32.gmra.mxu0 %v1464
        %v1486 = vpop.f32.mrf.mxu0
        %v1487 = vadd.f32 0.0, %v1486
        %1488 = vmatmul.f32.gmra.mxu0 %v1467
        %v1489 = vpop.f32.mrf.mxu0
        %v1490 = vadd.f32 0.0, %v1489
        %1491 = vdwg.mxu0
        %v1493 = vsel %vm614, %v1461, 0
        %v1496 = vsel %vm614, %v1462, 0
        %1498 = vmatpush.msra.mxu0 0.0
        %1499 = vmatpush.msra.mxu0 0.0
        %1500 = vmatpush.msra.mxu0 0.0
        %1501 = vmatpush.msra.mxu0 0.0
        %1502 = vmatpush.msra.mxu0 0.0
        %1503 = vmatpush.msra.mxu0 0.0
        %1504 = vmatpush.msra.mxu0 0.0
        %1505 = vmatpush.msra.mxu0 0.0
        %1506 = vmatpush.msra.mxu0 0.0
        %1507 = vmatpush.msra.mxu0 0.0
        %1508 = vmatpush.msra.mxu0 0.0
        %1509 = vmatpush.msra.mxu0 0.0
        %1510 = vmatpush.msra.mxu0 0.0
        %1511 = vmatpush.msra.mxu0 0.0
        %1512 = vmatpush.msra.mxu0 %v1490
        %1513 = vmatpush.msra.mxu0 %v1487
        %1514 = vmatmul.f32.gmra.mxu0 %v1493
        %v1515 = vpop.f32.mrf.mxu0
        %v1516 = vadd.f32 0.0, %v1515
        %1517 = vmatmul.f32.gmra.mxu0 %v1496
        %v1518 = vpop.f32.mrf.mxu0
        %v1519 = vadd.f32 0.0, %v1518
        %1520 = vdwg.mxu0
        %v1521 = vadd.f32 %v1461, %v1516
        %v1522 = vadd.f32 %v1462, %v1519
        %v1524 = vsel %vm614, %v1487, 0
        %v1527 = vsel %vm614, %v1490, 0
        %1529 = vmatpush.msra.mxu0 0.0
        %1530 = vmatpush.msra.mxu0 0.0
        %1531 = vmatpush.msra.mxu0 0.0
        %1532 = vmatpush.msra.mxu0 0.0
        %1533 = vmatpush.msra.mxu0 0.0
        %1534 = vmatpush.msra.mxu0 0.0
        %1535 = vmatpush.msra.mxu0 0.0
        %1536 = vmatpush.msra.mxu0 0.0
        %1537 = vmatpush.msra.mxu0 0.0
        %1538 = vmatpush.msra.mxu0 0.0
        %1539 = vmatpush.msra.mxu0 0.0
        %1540 = vmatpush.msra.mxu0 0.0
        %1541 = vmatpush.msra.mxu0 0.0
        %1542 = vmatpush.msra.mxu0 0.0
        %1543 = vmatpush.msra.mxu0 %v1490
        %1544 = vmatpush.msra.mxu0 %v1487
        %1545 = vmatmul.f32.gmra.mxu0 %v1524
        %v1546 = vpop.f32.mrf.mxu0
        %v1547 = vadd.f32 0.0, %v1546
        %1548 = vmatmul.f32.gmra.mxu0 %v1527
        %v1549 = vpop.f32.mrf.mxu0
        %v1550 = vadd.f32 0.0, %v1549
        %1551 = vdwg.mxu0
        %v1553 = vsel %vm614, %v1521, 0
        %v1556 = vsel %vm614, %v1522, 0
        %1558 = vmatpush.msra.mxu0 0.0
        %1559 = vmatpush.msra.mxu0 0.0
        %1560 = vmatpush.msra.mxu0 0.0
        %1561 = vmatpush.msra.mxu0 0.0
        %1562 = vmatpush.msra.mxu0 0.0
        %1563 = vmatpush.msra.mxu0 0.0
        %1564 = vmatpush.msra.mxu0 0.0
        %1565 = vmatpush.msra.mxu0 0.0
        %1566 = vmatpush.msra.mxu0 0.0
        %1567 = vmatpush.msra.mxu0 0.0
        %1568 = vmatpush.msra.mxu0 0.0
        %1569 = vmatpush.msra.mxu0 0.0
        %1570 = vmatpush.msra.mxu0 0.0
        %1571 = vmatpush.msra.mxu0 0.0
        %1572 = vmatpush.msra.mxu0 %v1550
        %1573 = vmatpush.msra.mxu0 %v1547
        %1574 = vmatmul.f32.gmra.mxu0 %v1553
        %v1575 = vpop.f32.mrf.mxu0
        %v1576 = vadd.f32 0.0, %v1575
        %1577 = vmatmul.f32.gmra.mxu0 %v1556
        %v1578 = vpop.f32.mrf.mxu0
        %v1579 = vadd.f32 0.0, %v1578
        %1580 = vdwg.mxu0
        %v1581 = vadd.f32 %v1521, %v1576
        %v1582 = vadd.f32 %v1522, %v1579
        %1585 = vrot.lane.b32.xlu0 %v581, 96
        %v1586 = vpop.permute.xlu0 %1585
        %1587 = vrot.lane.b32.xlu0 %v582, 96
        %v1588 = vpop.permute.xlu0 %1587
        %v1592 = vsel %vm614, %v1399, 0
        %v1595 = vsel %vm614, %v1400, 0
        %1597 = vmatpush.msra.mxu0 0.0
        %1598 = vmatpush.msra.mxu0 0.0
        %1599 = vmatpush.msra.mxu0 0.0
        %1600 = vmatpush.msra.mxu0 0.0
        %1601 = vmatpush.msra.mxu0 0.0
        %1602 = vmatpush.msra.mxu0 0.0
        %1603 = vmatpush.msra.mxu0 0.0
        %1604 = vmatpush.msra.mxu0 0.0
        %1605 = vmatpush.msra.mxu0 0.0
        %1606 = vmatpush.msra.mxu0 0.0
        %1607 = vmatpush.msra.mxu0 0.0
        %1608 = vmatpush.msra.mxu0 0.0
        %1609 = vmatpush.msra.mxu0 0.0
        %1610 = vmatpush.msra.mxu0 0.0
        %1611 = vmatpush.msra.mxu0 %v1588
        %1612 = vmatpush.msra.mxu0 %v1586
        %1613 = vmatmul.f32.gmra.mxu0 %v1592
        %v1614 = vpop.f32.mrf.mxu0
        %v1615 = vadd.f32 0.0, %v1614
        %1616 = vmatmul.f32.gmra.mxu0 %v1595
        %v1617 = vpop.f32.mrf.mxu0
        %v1618 = vadd.f32 0.0, %v1617
        %1619 = vdwg.mxu0
        %v1621 = vsel %vm672, %v1323, 0
        %v1624 = vsel %vm672, %v1324, 0
        %v1627 = vsel %vm672, %v1325, 0
        %v1630 = vsel %vm672, %v1326, 0
        %1632 = vmatpush.xpose.msra.mxu0 0.0
        %1633 = vmatpush.xpose.msra.mxu0 0.0
        %1634 = vmatpush.xpose.msra.mxu0 0.0
        %1635 = vmatpush.xpose.msra.mxu0 0.0
        %1636 = vmatpush.xpose.msra.mxu0 0.0
        %1637 = vmatpush.xpose.msra.mxu0 0.0
        %1638 = vmatpush.xpose.msra.mxu0 0.0
        %1639 = vmatpush.xpose.msra.mxu0 0.0
        %1640 = vmatpush.xpose.msra.mxu0 0.0
        %1641 = vmatpush.xpose.msra.mxu0 0.0
        %1642 = vmatpush.xpose.msra.mxu0 0.0
        %1643 = vmatpush.xpose.msra.mxu0 0.0
        %1644 = vmatpush.xpose.msra.mxu0 %v1630
        %1645 = vmatpush.xpose.msra.mxu0 %v1627
        %1646 = vmatpush.xpose.msra.mxu0 %v1624
        %1647 = vmatpush.xpose.msra.mxu0 %v1621
        %1648 = vmatmul.f32.gmra.mxu0 %v1335
        %v1649 = vpop.f32.mrf.mxu0
        %v1650 = vadd.f32 %v1615, %v1649
        %1651 = vmatmul.f32.gmra.mxu0 %v1337
        %v1652 = vpop.f32.mrf.mxu0
        %v1653 = vadd.f32 %v1618, %v1652
        %1654 = vdwg.mxu0
        %v1656 = vsel %vm614, %v1581, 0
        %v1659 = vsel %vm614, %v1582, 0
        %1661 = vmatpush.msra.mxu0 0.0
        %1662 = vmatpush.msra.mxu0 0.0
        %1663 = vmatpush.msra.mxu0 0.0
        %1664 = vmatpush.msra.mxu0 0.0
        %1665 = vmatpush.msra.mxu0 0.0
        %1666 = vmatpush.msra.mxu0 0.0
        %1667 = vmatpush.msra.mxu0 0.0
        %1668 = vmatpush.msra.mxu0 0.0
        %1669 = vmatpush.msra.mxu0 0.0
        %1670 = vmatpush.msra.mxu0 0.0
        %1671 = vmatpush.msra.mxu0 0.0
        %1672 = vmatpush.msra.mxu0 0.0
        %1673 = vmatpush.msra.mxu0 0.0
        %1674 = vmatpush.msra.mxu0 0.0
        %1675 = vmatpush.msra.mxu0 %v1653
        %1676 = vmatpush.msra.mxu0 %v1650
        %1677 = vmatmul.f32.gmra.mxu0 %v1656
        %v1678 = vpop.f32.mrf.mxu0
        %v1679 = vadd.f32 0.0, %v1678
        %1680 = vmatmul.f32.gmra.mxu0 %v1659
        %v1681 = vpop.f32.mrf.mxu0
        %v1682 = vadd.f32 0.0, %v1681
        %1683 = vdwg.mxu0
        %1684 = vrot.lane.b32.xlu0 %v666, 96
        %v1685 = vpop.permute.xlu0 %1684
        %1686 = vrot.lane.b32.xlu0 %v667, 96
        %v1687 = vpop.permute.xlu0 %1686
        %v1688 = vsel %vm672, %v1685, 0
        %v1690 = vsel %vm672, %v1687, 0
        %1692 = vmatpush.xpose.msra.mxu0 0.0
        %1693 = vmatpush.xpose.msra.mxu0 0.0
        %1694 = vmatpush.xpose.msra.mxu0 0.0
        %1695 = vmatpush.xpose.msra.mxu0 0.0
        %1696 = vmatpush.xpose.msra.mxu0 0.0
        %1697 = vmatpush.xpose.msra.mxu0 0.0
        %1698 = vmatpush.xpose.msra.mxu0 0.0
        %1699 = vmatpush.xpose.msra.mxu0 0.0
        %1700 = vmatpush.xpose.msra.mxu0 0.0
        %1701 = vmatpush.xpose.msra.mxu0 0.0
        %1702 = vmatpush.xpose.msra.mxu0 0.0
        %1703 = vmatpush.xpose.msra.mxu0 0.0
        %1704 = vmatpush.xpose.msra.mxu0 0.0
        %1705 = vmatpush.xpose.msra.mxu0 0.0
        %1706 = vmatpush.xpose.msra.mxu0 %v1341
        %1707 = vmatpush.xpose.msra.mxu0 %v1339
        %1708 = vmatmul.f32.gmra.mxu0 %v1688
        %v1709 = vpop.f32.mrf.mxu0
        %v1710 = vadd.f32 0.0, %v1709
        %1711 = vmatmul.f32.gmra.mxu0 %v1690
        %v1712 = vpop.f32.mrf.mxu0
        %v1713 = vadd.f32 0.0, %v1712
        %1714 = vdwg.mxu0
        %v1715 = vmul.f32 %v600, %v1710
        %v1716 = vmul.f32 %v601, %v1713
        %1717 = vmatpush.xpose.msra.mxu0 0.0
        %1718 = vmatpush.xpose.msra.mxu0 0.0
        %1719 = vmatpush.xpose.msra.mxu0 0.0
        %1720 = vmatpush.xpose.msra.mxu0 0.0
        %1721 = vmatpush.xpose.msra.mxu0 0.0
        %1722 = vmatpush.xpose.msra.mxu0 0.0
        %1723 = vmatpush.xpose.msra.mxu0 0.0
        %1724 = vmatpush.xpose.msra.mxu0 0.0
        %1725 = vmatpush.xpose.msra.mxu0 0.0
        %1726 = vmatpush.xpose.msra.mxu0 0.0
        %1727 = vmatpush.xpose.msra.mxu0 0.0
        %1728 = vmatpush.xpose.msra.mxu0 0.0
        %1729 = vmatpush.xpose.msra.mxu0 0.0
        %1730 = vmatpush.xpose.msra.mxu0 0.0
        %1731 = vmatpush.xpose.msra.mxu0 %v1374
        %1732 = vmatpush.xpose.msra.mxu0 %v1372
        %1733 = vmatmul.f32.gmra.mxu0 %v1688
        %v1734 = vpop.f32.mrf.mxu0
        %v1735 = vadd.f32 0.0, %v1734
        %1736 = vmatmul.f32.gmra.mxu0 %v1690
        %v1737 = vpop.f32.mrf.mxu0
        %v1738 = vadd.f32 0.0, %v1737
        %1739 = vdwg.mxu0
        %v1740 = vmul.f32 %v600, %v1735
        %v1741 = vmul.f32 %v601, %v1738
        %v1743 = vsel %vm614, %v1715, 0
        %v1746 = vsel %vm614, %v1716, 0
        %1748 = vmatpush.msra.mxu0 0.0
        %1749 = vmatpush.msra.mxu0 0.0
        %1750 = vmatpush.msra.mxu0 0.0
        %1751 = vmatpush.msra.mxu0 0.0
        %1752 = vmatpush.msra.mxu0 0.0
        %1753 = vmatpush.msra.mxu0 0.0
        %1754 = vmatpush.msra.mxu0 0.0
        %1755 = vmatpush.msra.mxu0 0.0
        %1756 = vmatpush.msra.mxu0 0.0
        %1757 = vmatpush.msra.mxu0 0.0
        %1758 = vmatpush.msra.mxu0 0.0
        %1759 = vmatpush.msra.mxu0 0.0
        %1760 = vmatpush.msra.mxu0 0.0
        %1761 = vmatpush.msra.mxu0 0.0
        %1762 = vmatpush.msra.mxu0 %v1682
        %1763 = vmatpush.msra.mxu0 %v1679
        %1764 = vmatmul.f32.gmra.mxu0 %v1743
        %v1765 = vpop.f32.mrf.mxu0
        %v1766 = vadd.f32 0.0, %v1765
        %1767 = vmatmul.f32.gmra.mxu0 %v1746
        %v1768 = vpop.f32.mrf.mxu0
        %v1769 = vadd.f32 0.0, %v1768
        %1770 = vdwg.mxu0
        %1771 = vmatpush.xpose.msra.mxu0 0.0
        %1772 = vmatpush.xpose.msra.mxu0 0.0
        %1773 = vmatpush.xpose.msra.mxu0 0.0
        %1774 = vmatpush.xpose.msra.mxu0 0.0
        %1775 = vmatpush.xpose.msra.mxu0 0.0
        %1776 = vmatpush.xpose.msra.mxu0 0.0
        %1777 = vmatpush.xpose.msra.mxu0 0.0
        %1778 = vmatpush.xpose.msra.mxu0 0.0
        %1779 = vmatpush.xpose.msra.mxu0 0.0
        %1780 = vmatpush.xpose.msra.mxu0 0.0
        %1781 = vmatpush.xpose.msra.mxu0 0.0
        %1782 = vmatpush.xpose.msra.mxu0 0.0
        %1783 = vmatpush.xpose.msra.mxu0 %v1630
        %1784 = vmatpush.xpose.msra.mxu0 %v1627
        %1785 = vmatpush.xpose.msra.mxu0 %v1624
        %1786 = vmatpush.xpose.msra.mxu0 %v1621
        %1787 = vmatmul.f32.gmra.mxu0 %v1688
        %v1788 = vpop.f32.mrf.mxu0
        %v1789 = vadd.f32 %v1766, %v1788
        %1790 = vmatmul.f32.gmra.mxu0 %v1690
        %v1791 = vpop.f32.mrf.mxu0
        %v1792 = vadd.f32 %v1769, %v1791
        %1793 = vdwg.mxu0
        %v1795 = vsel %vm614, %v1740, 0
        %v1798 = vsel %vm614, %v1741, 0
        %1800 = vmatpush.msra.mxu0 0.0
        %1801 = vmatpush.msra.mxu0 0.0
        %1802 = vmatpush.msra.mxu0 0.0
        %1803 = vmatpush.msra.mxu0 0.0
        %1804 = vmatpush.msra.mxu0 0.0
        %1805 = vmatpush.msra.mxu0 0.0
        %1806 = vmatpush.msra.mxu0 0.0
        %1807 = vmatpush.msra.mxu0 0.0
        %1808 = vmatpush.msra.mxu0 0.0
        %1809 = vmatpush.msra.mxu0 0.0
        %1810 = vmatpush.msra.mxu0 0.0
        %1811 = vmatpush.msra.mxu0 0.0
        %1812 = vmatpush.msra.mxu0 0.0
        %1813 = vmatpush.msra.mxu0 0.0
        %1814 = vmatpush.msra.mxu0 %v1588
        %1815 = vmatpush.msra.mxu0 %v1586
        %1816 = vmatmul.f32.gmra.mxu0 %v1795
        %v1817 = vpop.f32.mrf.mxu0
        %v1818 = vadd.f32 0.0, %v1817
        %1819 = vmatmul.f32.gmra.mxu0 %v1798
        %v1820 = vpop.f32.mrf.mxu0
        %v1821 = vadd.f32 0.0, %v1820
        %1822 = vdwg.mxu0
        %v1823 = vadd.f32 %v1789, %v1818
        %v1824 = vadd.f32 %v1792, %v1821
        %1826 = vrot.lane.b32.xlu0 %v1155, 96
        %v1827 = vpop.permute.xlu0 %1826
        %v1829 = vmul.f32 %v1323, %v1827
        %v1830 = vmul.f32 %v1324, %v1827
        %v1831 = vmul.f32 %v1325, %v1827
        %v1832 = vmul.f32 %v1326, %v1827
        %1833 = vxpose.xlu0.b32.start [1/16] %v1679, 128
        %1834 = vxpose.xlu0.b32.cont [2/16] %v1682, 128
        %1835 = vxpose.xlu0.b32.cont [3/16] 0.0, 128
        %1836 = vxpose.xlu0.b32.cont [4/16] 0.0, 128
        %1837 = vxpose.xlu0.b32.cont [5/16] 0.0, 128
        %1838 = vxpose.xlu0.b32.cont [6/16] 0.0, 128
        %1839 = vxpose.xlu0.b32.cont [7/16] 0.0, 128
        %1840 = vxpose.xlu0.b32.cont [8/16] 0.0, 128
        %1841 = vxpose.xlu0.b32.cont [9/16] 0.0, 128
        %1842 = vxpose.xlu0.b32.cont [10/16] 0.0, 128
        %1843 = vxpose.xlu0.b32.cont [11/16] 0.0, 128
        %1844 = vxpose.xlu0.b32.cont [12/16] 0.0, 128
        %1845 = vxpose.xlu0.b32.cont [13/16] 0.0, 128
        %1846 = vxpose.xlu0.b32.cont [14/16] 0.0, 128
        %1847 = vxpose.xlu0.b32.cont [15/16] 0.0, 128
        %1848 = vxpose.xlu0.b32.end [16/16] 0.0, 128
        %v1849 = vpop.trf.xlu0
        %v1850 = vpop.trf.xlu0
        %v1851 = vpop.trf.xlu0
        %v1852 = vpop.trf.xlu0
        %v1853 = vpop.trf.xlu0
        %v1854 = vpop.trf.xlu0
        %v1855 = vpop.trf.xlu0
        %v1856 = vpop.trf.xlu0
        %v1857 = vpop.trf.xlu0
        %v1858 = vpop.trf.xlu0
        %v1859 = vpop.trf.xlu0
        %v1860 = vpop.trf.xlu0
        %v1861 = vpop.trf.xlu0
        %v1862 = vpop.trf.xlu0
        %v1863 = vpop.trf.xlu0
        %v1864 = vpop.trf.xlu0
        %1867 = vrot.lane.b32.xlu0 %v1160, 96
        %v1868 = vpop.permute.xlu0 %1867
        %1869 = vrot.lane.b32.xlu0 %v1161, 96
        %v1870 = vpop.permute.xlu0 %1869
        %v1874 = vsel %vm614, %v1849, 0
        %v1877 = vsel %vm614, %v1850, 0
        %v1880 = vsel %vm614, %v1851, 0
        %v1883 = vsel %vm614, %v1852, 0
        %1885 = vmatpush.msra.mxu0 0.0
        %1886 = vmatpush.msra.mxu0 0.0
        %1887 = vmatpush.msra.mxu0 0.0
        %1888 = vmatpush.msra.mxu0 0.0
        %1889 = vmatpush.msra.mxu0 0.0
        %1890 = vmatpush.msra.mxu0 0.0
        %1891 = vmatpush.msra.mxu0 0.0
        %1892 = vmatpush.msra.mxu0 0.0
        %1893 = vmatpush.msra.mxu0 0.0
        %1894 = vmatpush.msra.mxu0 0.0
        %1895 = vmatpush.msra.mxu0 0.0
        %1896 = vmatpush.msra.mxu0 0.0
        %1897 = vmatpush.msra.mxu0 0.0
        %1898 = vmatpush.msra.mxu0 0.0
        %1899 = vmatpush.msra.mxu0 %v1870
        %1900 = vmatpush.msra.mxu0 %v1868
        %1901 = vmatmul.f32.gmra.mxu0 %v1874
        %v1902 = vpop.f32.mrf.mxu0
        %v1903 = vadd.f32 0.0, %v1902
        %1904 = vmatmul.f32.gmra.mxu0 %v1877
        %v1905 = vpop.f32.mrf.mxu0
        %v1906 = vadd.f32 0.0, %v1905
        %1907 = vmatmul.f32.gmra.mxu0 %v1880
        %v1908 = vpop.f32.mrf.mxu0
        %v1909 = vadd.f32 0.0, %v1908
        %1910 = vmatmul.f32.gmra.mxu0 %v1883
        %v1911 = vpop.f32.mrf.mxu0
        %v1912 = vadd.f32 0.0, %v1911
        %1913 = vdwg.mxu0
        %v1914 = vadd.f32 %v1829, %v1903
        %v1915 = vadd.f32 %v1830, %v1906
        %v1916 = vadd.f32 %v1831, %v1909
        %v1917 = vadd.f32 %v1832, %v1912
        %1918 = vxpose.xlu0.b32.start [1/16] %v1586, 128
        %1919 = vxpose.xlu0.b32.cont [2/16] %v1588, 128
        %1920 = vxpose.xlu0.b32.cont [3/16] 0.0, 128
        %1921 = vxpose.xlu0.b32.cont [4/16] 0.0, 128
        %1922 = vxpose.xlu0.b32.cont [5/16] 0.0, 128
        %1923 = vxpose.xlu0.b32.cont [6/16] 0.0, 128
        %1924 = vxpose.xlu0.b32.cont [7/16] 0.0, 128
        %1925 = vxpose.xlu0.b32.cont [8/16] 0.0, 128
        %1926 = vxpose.xlu0.b32.cont [9/16] 0.0, 128
        %1927 = vxpose.xlu0.b32.cont [10/16] 0.0, 128
        %1928 = vxpose.xlu0.b32.cont [11/16] 0.0, 128
        %1929 = vxpose.xlu0.b32.cont [12/16] 0.0, 128
        %1930 = vxpose.xlu0.b32.cont [13/16] 0.0, 128
        %1931 = vxpose.xlu0.b32.cont [14/16] 0.0, 128
        %1932 = vxpose.xlu0.b32.cont [15/16] 0.0, 128
        %1933 = vxpose.xlu0.b32.end [16/16] 0.0, 128
        %v1934 = vpop.trf.xlu0
        %v1935 = vpop.trf.xlu0
        %v1936 = vpop.trf.xlu0
        %v1937 = vpop.trf.xlu0
        %v1938 = vpop.trf.xlu0
        %v1939 = vpop.trf.xlu0
        %v1940 = vpop.trf.xlu0
        %v1941 = vpop.trf.xlu0
        %v1942 = vpop.trf.xlu0
        %v1943 = vpop.trf.xlu0
        %v1944 = vpop.trf.xlu0
        %v1945 = vpop.trf.xlu0
        %v1946 = vpop.trf.xlu0
        %v1947 = vpop.trf.xlu0
        %v1948 = vpop.trf.xlu0
        %v1949 = vpop.trf.xlu0
        %1952 = vrot.lane.b32.xlu0 %v1239, 96
        %v1953 = vpop.permute.xlu0 %1952
        %1954 = vrot.lane.b32.xlu0 %v1240, 96
        %v1955 = vpop.permute.xlu0 %1954
        %v1959 = vsel %vm614, %v1934, 0
        %v1962 = vsel %vm614, %v1935, 0
        %v1965 = vsel %vm614, %v1936, 0
        %v1968 = vsel %vm614, %v1937, 0
        %1970 = vmatpush.msra.mxu0 0.0
        %1971 = vmatpush.msra.mxu0 0.0
        %1972 = vmatpush.msra.mxu0 0.0
        %1973 = vmatpush.msra.mxu0 0.0
        %1974 = vmatpush.msra.mxu0 0.0
        %1975 = vmatpush.msra.mxu0 0.0
        %1976 = vmatpush.msra.mxu0 0.0
        %1977 = vmatpush.msra.mxu0 0.0
        %1978 = vmatpush.msra.mxu0 0.0
        %1979 = vmatpush.msra.mxu0 0.0
        %1980 = vmatpush.msra.mxu0 0.0
        %1981 = vmatpush.msra.mxu0 0.0
        %1982 = vmatpush.msra.mxu0 0.0
        %1983 = vmatpush.msra.mxu0 0.0
        %1984 = vmatpush.msra.mxu0 %v1955
        %1985 = vmatpush.msra.mxu0 %v1953
        %1986 = vmatmul.f32.gmra.mxu0 %v1959
        %v1987 = vpop.f32.mrf.mxu0
        %v1988 = vadd.f32 0.0, %v1987
        %1989 = vmatmul.f32.gmra.mxu0 %v1962
        %v1990 = vpop.f32.mrf.mxu0
        %v1991 = vadd.f32 0.0, %v1990
        %1992 = vmatmul.f32.gmra.mxu0 %v1965
        %v1993 = vpop.f32.mrf.mxu0
        %v1994 = vadd.f32 0.0, %v1993
        %1995 = vmatmul.f32.gmra.mxu0 %v1968
        %v1996 = vpop.f32.mrf.mxu0
        %v1997 = vadd.f32 0.0, %v1996
        %1998 = vdwg.mxu0
        %v1999 = vadd.f32 %v1914, %v1988
        %v2000 = vadd.f32 %v1915, %v1991
        %v2001 = vadd.f32 %v1916, %v1994
        %v2002 = vadd.f32 %v1917, %v1997
        %2003 = vst.msk [vmem:[%s1322] sm:$0xff] %vm672, %v1999
        %2004 = vst.msk [vmem:[%s1322 + $0x8] sm:$0xff] %vm672, %v2000
        %2005 = vst.msk [vmem:[%s1322 + $0x10] sm:$0xff] %vm672, %v2001
        %2006 = vst.msk [vmem:[%s1322 + $0x18] sm:$0xff] %vm672, %v2002
        %2009 = vrot.lane.b32.xlu0 %v1823, 32
        %v2010 = vpop.permute.xlu0 %2009
        %2011 = vrot.lane.b32.xlu0 %v1824, 32
        %v2012 = vpop.permute.xlu0 %2011
        %v2015 = vsel %vm672, %v1153, %v2010
        %v2016 = vsel %vm672, %v1154, %v2012
        %v2017 = vpack.c.bf16 %v2015, %v2015
        %v2018 = vpack.c.bf16 %v2016, %v2016
        %vm2019 = vcmask 519168
        %2020 = vst.msk [vmem:[%s540] sm:$0xf] %vm2019, %v2017
        %2021 = vst.msk [vmem:[%s540 + $0x4] sm:$0xf] %vm2019, %v2018
        %s2022 = sand.u32 %s243, 1
        %s2023 = scalar_lea.sflag [#allocation5], %s2022
        %s2024 = sand.u32 %s243, 1
        %s2025 = smul.addr %s2024, 8
        %s2026 = scalar_lea.vmem [#allocation14], %s2025
        // Predicated region
        $region73: #{tpu_custom_call.1} parent=43 // pred_check
          %p2027 = pneg %p253
        $region74: #{tpu_custom_call.1} parent=43 // pred_check_branch
          %2029 = sbr.rel (%p2027) target = $region76
        $region75: #{tpu_custom_call.1} parent=43 // pred_region
          %s2030 = smul.u32 2, %s39
          %2032 = vsyncadd %s2023, 0
          %s2033 = sadd.s32 %s38, %s2030
          %s2034 = smul.addr %s37, 6
          %s2035 = sadd.s32 %s2033, %s2034
          %s2036 = smul.addr %s2035, 4
          %s2037 = scalar_lea.hbm %s6, %s2036
          %s2038 = sshll.u32 %s2026, 4
          %s2039 = int_to_ptr.vmem [resolvable:$true] %s2038
          %s2040 = sshll.u32 %s2037, 4
          %s2041 = int_to_ptr.hbm [resolvable:$true] %s2040
          %2046 = dma.vmem_to_hbm [thread:$0]  %s2039, 128, %s2041, %s2023, 64, 64, 4
        $region76: #{tpu_custom_call.1} parent=43 // pred_fallthru
          _
      $region44: #{tpu_custom_call.1} parent=5 // pred_fallthru
        _
      %p2047 = scmp.le.s32.totalorder 2, %s27
      // Predicated region
      $region77: #{tpu_custom_call.1} parent=5 // pred_check
        %p2048 = pneg %p2047
      $region78: #{tpu_custom_call.1} parent=5 // pred_check_branch
        %2050 = sbr.rel (%p2048) target = $region80
      $region79: #{tpu_custom_call.1} parent=5 // pred_region
        %s2051 = ssub.s32 %s27, 2
        // Predicated region
        $region81: #{tpu_custom_call.1} parent=79 // pred_check
          %p2052 = pneg %p259
        $region82: #{tpu_custom_call.1} parent=79 // pred_check_branch
          %2054 = sbr.rel (%p2052) target = $region84
        $region83: #{tpu_custom_call.1} parent=79 // pred_region
          %s2055 = sand.u32 %s244, 1
          %s2056 = scalar_lea.sflag [#allocation5], %s2055
          %s2057 = sand.u32 %s244, 1
          %s2058 = smul.addr %s2057, 8
          %s2059 = scalar_lea.vmem [#allocation14], %s2058
          %2061 = dma.done %s2056, 128
        $region84: #{tpu_custom_call.1} parent=79 // pred_fallthru
          _
      $region80: #{tpu_custom_call.1} parent=5 // pred_fallthru
        _
    $region6: #{tpu_custom_call.1} parent=1 // loop_footer
      %s31 = sadd.s32 1, %s27
    $region7: #{tpu_custom_call.1} parent=1 // loop_footer_branch
      %26 = sbr.rel target = $region3
    $region8: #{tpu_custom_call.1} parent=1 // loop_exit
      _
    %2062 = vsyncpa [#allocation4], 1
    %s2063 = scalar_lea.sflag [#allocation4], 1
    %2064 = vsyncpa %s2063, 1
    %2065 = vsyncpa [#allocation7], 1
    %s2066 = scalar_lea.sflag [#allocation7], 1
    %2067 = vsyncpa %s2066, 1
    %2068 = vsyncpa [#allocation10], 1
    %s2069 = scalar_lea.sflag [#allocation10], 1
    %2070 = vsyncpa %s2069, 1
    %2071 = vsyncpa [#allocation13], 1
    %s2072 = scalar_lea.sflag [#allocation13], 1
    %2073 = vsyncpa %s2072, 1
    %2074 = vsyncpa [#allocation5], 1
    %s2075 = scalar_lea.sflag [#allocation5], 1
    %2076 = vsyncpa %s2075, 1

</llo_original>
